<compile_context>
chip_gen: v6e
topology: v6e:2x2x1
jax: 0.10.0
libtpu: 0.0.40
codegen_flags: <defaults>
</compile_context>

<pallas_src>
import functools

import jax
import jax.numpy as jnp
from jax.experimental import pallas as pl
from jax.experimental.pallas import tpu as pltpu


# ----------------------------- Pallas kernel --------------------------------
def _bilstm_kernel(len_ref, x_ref, wih_ref, whh_ref, b_ref, h_out_ref, xp_ref):
    """One grid step == one LSTM direction; the full T-step recurrence runs here.

    len_ref  : (B, 1)     int32  valid lengths (padded batch rows -> 0)
    x_ref    : (T*B, E)   f32    time-major flattened embeddings (shared by both dirs)
    wih_ref  : (E, 4H)    f32    direction-selected input weights (gate order i,f,g,o)
    whh_ref  : (H, 4H)    f32    direction-selected recurrent weights
    b_ref    : (1, 4H)    f32    direction-selected bias (b_ih + b_hh)
    h_out_ref: (B, H)     f32    final hidden state for this direction
    xp_ref   : (T, B, 4H) f32    VMEM scratch holding the hoisted input projection
    """
    d = pl.program_id(0)                     # 0 = forward, 1 = reverse
    T, B, H4 = xp_ref.shape
    H = H4 // 4

    # --- hoisted input projection: ONE MXU call per direction -----------------
    xp = jnp.dot(x_ref[...], wih_ref[...],
                 preferred_element_type=jnp.float32) + b_ref[...]    # (T*B, 4H)
    for tt in range(T):                      # static, vreg-aligned scatter (B = 8k)
        xp_ref[tt] = xp[tt * B:(tt + 1) * B, :]
    # TODO(synk): for very large T this slab/scatter should be chunked along T.

    lens = len_ref[...]                      # (B, 1) int32
    whh = whh_ref[...]                       # keep resident in vregs across the loop

    def step(s, carry):
        h, c = carry
        # forward walks t = 0..T-1, reverse walks t = T-1..0; with the (t < len)
        # mask this reproduces pack_padded_sequence semantics exactly.
        t = jnp.where(d == 0, s, T - 1 - s)
        gates = xp_ref[t] + jnp.dot(h, whh, preferred_element_type=jnp.float32)
        # NOTE: with H < 128 these lane slices cost a few selects per step; for
        # production H (multiple of 128) they become whole-vreg slices (free).
        i_g = jax.nn.sigmoid(gates[:, 0 * H:1 * H])
        f_g = jax.nn.sigmoid(gates[:, 1 * H:2 * H])
        g_g = jnp.tanh(gates[:, 2 * H:3 * H])
        o_g = jax.nn.sigmoid(gates[:, 3 * H:4 * H])
        c_new = f_g * c + i_g * g_g
        h_new = o_g * jnp.tanh(c_new)
        valid = t < lens                     # (B, 1) packed-sequence mask
        return jnp.where(valid, h_new, h), jnp.where(valid, c_new, c)

    zeros = jnp.zeros((B, H), jnp.float32)
    h_fin, _ = jax.lax.fori_loop(0, T, step, (zeros, zeros), unroll=True)
    h_out_ref[...] = h_fin                   # single store, after the recurrence


def lstm_final_hidden(x_flat, lens, T, w_ih, w_hh, bias):
    """x_flat: [T*B, E] f32 time-major flattened, lens: [B] int32 (B multiple of 8).
    w_ih: [D, E, 4H], w_hh: [D, H, 4H], bias: [D, 1, 4H]. Returns [D, B, H] f32."""
    TB, E = x_flat.shape
    B = TB // T
    D, H, H4 = w_hh.shape
    lens2d = lens.astype(jnp.int32).reshape(B, 1)

    return pl.pallas_call(
        _bilstm_kernel,
        out_shape=jax.ShapeDtypeStruct((D, B, H), jnp.float32),
        grid_spec=pltpu.PrefetchScalarGridSpec(
            num_scalar_prefetch=0,
            grid=(D,),
            in_specs=[
                pl.BlockSpec((B, 1), lambda d: (0, 0)),            # lengths
                pl.BlockSpec((TB, E), lambda d: (0, 0)),           # x (DMA'd once)
                pl.BlockSpec((None, E, H4), lambda d: (d, 0, 0)),  # W_ih[d]
                pl.BlockSpec((None, H, H4), lambda d: (d, 0, 0)),  # W_hh[d]
                pl.BlockSpec((None, 1, H4), lambda d: (d, 0, 0)),  # bias[d]
            ],
            out_specs=pl.BlockSpec((None, B, H), lambda d: (d, 0, 0)),
            scratch_shapes=[pltpu.VMEM((T, B, H4), jnp.float32)],  # x-projection
        ),
        compiler_params=pltpu.CompilerParams(
            # directions are fully independent -> megacore-parallel on v7x
            dimension_semantics=("parallel",)),
    )(lens2d, x_flat, w_ih, w_hh, bias)


# ------------------------------- glue / model -------------------------------
def question_encoder_forward(params, q, q_len, bidirectional):
    B, T = q.shape
    num_dir = params["w_ih"].shape[0]
    assert num_dir == (2 if bidirectional else 1)

    # Pad batch to a sublane multiple; padded rows get length 0 (never updated).
    B_pad = ((B + 7) // 8) * 8
    pad = B_pad - B
    q_p = jnp.pad(q, ((0, pad), (0, 0)))
    len_p = jnp.pad(q_len.astype(jnp.int32), (0, pad))

    # WordEmbedding (dropout is identity at inference). The gather is emitted
    # directly in flattened time-major order -> no [B,T,E] transpose through HBM.
    tok_tm = jnp.transpose(q_p, (1, 0)).reshape(T * B_pad)          # tiny int transpose
    x_flat = jnp.take(params["emb"], tok_tm, axis=0)                # [T*B_pad, E]

    h = lstm_final_hidden(x_flat, len_p, T,
                          params["w_ih"], params["w_hh"], params["b"])  # [D, B_pad, H]
    h = h[:, :B, :]
    # torch: h [D, B, H] -> transpose(0,1) -> flatten(start_dim=1)
    return jnp.transpose(h, (1, 0, 2)).reshape(B, -1)


# ---------------------------- pure-JAX reference -----------------------------
def reverse_within_length(x_bte, q_len):
    """Reverse each sequence inside its valid length (positions >= len untouched)."""
    B, T, _ = x_bte.shape
    t = jnp.arange(T)[None, :]
    lens = q_len[:, None]
    idx = jnp.where(t < lens, lens - 1 - t, t)
    return jnp.take_along_axis(x_bte, idx[:, :, None], axis=1)


def lstm_ref_direction(x_bte, q_len, w_ih, w_hh, bias):
    B, T, _ = x_bte.shape
    H = w_hh.shape[0]

    def step(carry, t):
        h, c = carry
        x_t = x_bte[:, t, :]
        gates = x_t @ w_ih + h @ w_hh + bias[None, :]
        i_g = jax.nn.sigmoid(gates[:, :H])
        f_g = jax.nn.sigmoid(gates[:, H:2 * H])
        g_g = jnp.tanh(gates[:, 2 * H:3 * H])
        o_g = jax.nn.sigmoid(gates[:, 3 * H:])
        c_new = f_g * c + i_g * g_g
        h_new = o_g * jnp.tanh(c_new)
        m = (t < q_len)[:, None]
        return (jnp.where(m, h_new, h), jnp.where(m, c_new, c)), None

    init = (jnp.zeros((B, H), jnp.float32), jnp.zeros((B, H), jnp.float32))
    (h, _), _ = jax.lax.scan(step, init, jnp.arange(T))
    return h


def question_encoder_ref(params, q, q_len, bidirectional):
    emb = jnp.take(params["emb"], q, axis=0)
    h_fwd = lstm_ref_direction(emb, q_len, params["w_ih"][0],
                               params["w_hh"][0], params["b"][0, 0])
    if not bidirectional:
        return h_fwd
    emb_rev = reverse_within_length(emb, q_len)
    h_bwd = lstm_ref_direction(emb_rev, q_len, params["w_ih"][1],
                               params["w_hh"][1], params["b"][1, 0])
    return jnp.concatenate([h_fwd, h_bwd], axis=-1)


# ------------------------------------ main -----------------------------------
if __name__ == "__main__":
    # synthetic config (mirrors module __init__ shapes)
    NTOKEN = 50
    EMB_DIM = 32        # config.emb_dim
    LSTM_OUT = 32       # config.lstm_out
    BIDIRECTIONAL = True
    B, T = 2, 8
    num_dir = 2 if BIDIRECTIONAL else 1

    key = jax.random.PRNGKey(0)
    ks = jax.random.split(key, 10)
    k_scale = 1.0 / jnp.sqrt(jnp.float32(LSTM_OUT))

    def unif(k, shape):
        return jax.random.uniform(k, shape, jnp.float32, -k_scale, k_scale)

    params = {
        # nn.Embedding(ntoken + 1, emb_dim); row `ntoken` acts as the padding row
        "emb": jax.random.normal(ks[0], (NTOKEN + 1, EMB_DIM), jnp.float32) * 0.1,
        # weights stored transposed and direction-stacked: [D, E, 4H] / [D, H, 4H];
        # bias = b_ih + b_hh, shape [D, 1, 4H]; gate order i,f,g,o (torch.nn.LSTM)
        "w_ih": jnp.stack([unif(ks[1], (EMB_DIM, 4 * LSTM_OUT)),
                           unif(ks[5], (EMB_DIM, 4 * LSTM_OUT))])[:num_dir],
        "w_hh": jnp.stack([unif(ks[2], (LSTM_OUT, 4 * LSTM_OUT)),
                           unif(ks[6], (LSTM_OUT, 4 * LSTM_OUT))])[:num_dir],
        "b": jnp.stack([
            (unif(ks[3], (4 * LSTM_OUT,)) + unif(ks[4], (4 * LSTM_OUT,))).reshape(1, -1),
            (unif(ks[7], (4 * LSTM_OUT,)) + unif(ks[8], (4 * LSTM_OUT,))).reshape(1, -1),
        ])[:num_dir],
    }

    # inputs: token ids [B, T] and per-sequence lengths [B] (padding filled with NTOKEN)
    q_len = jnp.array([T, 5], dtype=jnp.int32)
    q = jax.random.randint(ks[9], (B, T), 0, NTOKEN, dtype=jnp.int32)
    pad_mask = jnp.arange(T)[None, :] >= q_len[:, None]
    q = jnp.where(pad_mask, NTOKEN, q)

    fwd = jax.jit(functools.partial(question_encoder_forward, bidirectional=BIDIRECTIONAL))
    out = jax.block_until_ready(fwd(params, q, q_len))

    ref = question_encoder_ref(params, q, q_len, BIDIRECTIONAL)
    assert out.shape == (B, num_dir * LSTM_OUT)
    assert jnp.allclose(out, ref, atol=1e-5, rtol=1e-5), "kernel does not match reference"

    # TODO(synk): embedding dropout (WordEmbedding.use_dropout) is inference-identity
    # and therefore omitted; bf16 matmul casting (v6e/v7x) left out to keep the tight
    # f32 reference check.
    print("KERNEL_OK")
</pallas_src>

<mosaic_0001>
module attributes {stable_mosaic.version = 11 : i64} {
  func.func @_bilstm_kernel(%arg0: i32, %arg1: memref<8x1xi32, #tpu.memory_space<vmem>>, %arg2: memref<64x32xf32, #tpu.memory_space<vmem>>, %arg3: memref<1x32x128xf32, #tpu.memory_space<vmem>>, %arg4: memref<1x32x128xf32, #tpu.memory_space<vmem>>, %arg5: memref<1x1x128xf32, #tpu.memory_space<vmem>>, %arg6: memref<1x8x32xf32, #tpu.memory_space<vmem>>, %arg7: memref<8x8x128xf32, #tpu.memory_space<vmem>>) attributes {dimension_semantics = [#tpu.dimension_semantics<parallel>], iteration_bounds = array<i64: 2>, scalar_prefetch = 0 : i64, scratch_operands = 1 : i64, tpu.core_type = #tpu.core_type<tc>, window_params = [{pipeline_mode = #tpu.pipeline_mode<synchronous>, transform_indices = @transform_0, window_bounds = array<i64: 8, 1>}, {pipeline_mode = #tpu.pipeline_mode<synchronous>, transform_indices = @transform_1, window_bounds = array<i64: 64, 32>}, {transform_indices = @transform_2, window_bounds = array<i64: 1, 32, 128>}, {transform_indices = @transform_3, window_bounds = array<i64: 1, 32, 128>}, {transform_indices = @transform_4, window_bounds = array<i64: 1, 1, 128>}, {transform_indices = @transform_5, window_bounds = array<i64: 1, 8, 32>}]} {
    %c0 = arith.constant 0 : index
    %c0_0 = arith.constant 0 : index
    %0 = vector.load %arg2[%c0, %c0_0] : memref<64x32xf32, #tpu.memory_space<vmem>>, vector<64x32xf32>
    %c0_1 = arith.constant 0 : index
    %c0_2 = arith.constant 0 : index
    %c0_3 = arith.constant 0 : index
    %1 = vector.load %arg3[%c0_1, %c0_2, %c0_3] : memref<1x32x128xf32, #tpu.memory_space<vmem>>, vector<1x32x128xf32>
    %2 = vector.shape_cast %1 : vector<1x32x128xf32> to vector<32x128xf32>
    %cst = arith.constant dense<0.000000e+00> : vector<64x128xf32>
    %3 = tpu.matmul %0, %2, %cst {dimension_numbers = #tpu.dot_dimension_numbers<[1], [0], [0], [1], [0, 0, 1, 1], [], []>} : vector<64x32xf32>, vector<32x128xf32>, vector<64x128xf32> -> vector<64x128xf32>
    %c0_4 = arith.constant 0 : index
    %c0_5 = arith.constant 0 : index
    %c0_6 = arith.constant 0 : index
    %4 = vector.load %arg5[%c0_4, %c0_5, %c0_6] : memref<1x1x128xf32, #tpu.memory_space<vmem>>, vector<1x1x128xf32>
    %5 = vector.shape_cast %4 : vector<1x1x128xf32> to vector<1x128xf32>
    %6 = vector.broadcast %5 : vector<1x128xf32> to vector<64x128xf32>
    %7 = arith.addf %3, %6 : vector<64x128xf32>
    %8 = vector.extract_strided_slice %7 {offsets = [0, 0], sizes = [8, 128], strides = [1, 1]} : vector<64x128xf32> to vector<8x128xf32>
    %c0_7 = arith.constant 0 : index
    %c0_8 = arith.constant 0 : index
    %c0_9 = arith.constant 0 : index
    %9 = vector.load %arg7[%c0_7, %c0_8, %c0_9] : memref<8x8x128xf32, #tpu.memory_space<vmem>>, vector<1x8x128xf32>
    %10 = vector.shape_cast %9 : vector<1x8x128xf32> to vector<8x128xf32>
    %11 = vector.shape_cast %8 : vector<8x128xf32> to vector<1x8x128xf32>
    tpu.vector_store %arg7[%c0_7, %c0_8, %c0_9], %11 {strides = array<i32>} : memref<8x8x128xf32, #tpu.memory_space<vmem>>, vector<1x8x128xf32>,
    %12 = vector.extract_strided_slice %7 {offsets = [8, 0], sizes = [8, 128], strides = [1, 1]} : vector<64x128xf32> to vector<8x128xf32>
    %c1 = arith.constant 1 : index
    %c0_10 = arith.constant 0 : index
    %c0_11 = arith.constant 0 : index
    %13 = vector.load %arg7[%c1, %c0_10, %c0_11] : memref<8x8x128xf32, #tpu.memory_space<vmem>>, vector<1x8x128xf32>
    %14 = vector.shape_cast %13 : vector<1x8x128xf32> to vector<8x128xf32>
    %15 = vector.shape_cast %12 : vector<8x128xf32> to vector<1x8x128xf32>
    tpu.vector_store %arg7[%c1, %c0_10, %c0_11], %15 {strides = array<i32>} : memref<8x8x128xf32, #tpu.memory_space<vmem>>, vector<1x8x128xf32>,
    %16 = vector.extract_strided_slice %7 {offsets = [16, 0], sizes = [8, 128], strides = [1, 1]} : vector<64x128xf32> to vector<8x128xf32>
    %c2 = arith.constant 2 : index
    %c0_12 = arith.constant 0 : index
    %c0_13 = arith.constant 0 : index
    %17 = vector.load %arg7[%c2, %c0_12, %c0_13] : memref<8x8x128xf32, #tpu.memory_space<vmem>>, vector<1x8x128xf32>
    %18 = vector.shape_cast %17 : vector<1x8x128xf32> to vector<8x128xf32>
    %19 = vector.shape_cast %16 : vector<8x128xf32> to vector<1x8x128xf32>
    tpu.vector_store %arg7[%c2, %c0_12, %c0_13], %19 {strides = array<i32>} : memref<8x8x128xf32, #tpu.memory_space<vmem>>, vector<1x8x128xf32>,
    %20 = vector.extract_strided_slice %7 {offsets = [24, 0], sizes = [8, 128], strides = [1, 1]} : vector<64x128xf32> to vector<8x128xf32>
    %c3 = arith.constant 3 : index
    %c0_14 = arith.constant 0 : index
    %c0_15 = arith.constant 0 : index
    %21 = vector.load %arg7[%c3, %c0_14, %c0_15] : memref<8x8x128xf32, #tpu.memory_space<vmem>>, vector<1x8x128xf32>
    %22 = vector.shape_cast %21 : vector<1x8x128xf32> to vector<8x128xf32>
    %23 = vector.shape_cast %20 : vector<8x128xf32> to vector<1x8x128xf32>
    tpu.vector_store %arg7[%c3, %c0_14, %c0_15], %23 {strides = array<i32>} : memref<8x8x128xf32, #tpu.memory_space<vmem>>, vector<1x8x128xf32>,
    %24 = vector.extract_strided_slice %7 {offsets = [32, 0], sizes = [8, 128], strides = [1, 1]} : vector<64x128xf32> to vector<8x128xf32>
    %c4 = arith.constant 4 : index
    %c0_16 = arith.constant 0 : index
    %c0_17 = arith.constant 0 : index
    %25 = vector.load %arg7[%c4, %c0_16, %c0_17] : memref<8x8x128xf32, #tpu.memory_space<vmem>>, vector<1x8x128xf32>
    %26 = vector.shape_cast %25 : vector<1x8x128xf32> to vector<8x128xf32>
    %27 = vector.shape_cast %24 : vector<8x128xf32> to vector<1x8x128xf32>
    tpu.vector_store %arg7[%c4, %c0_16, %c0_17], %27 {strides = array<i32>} : memref<8x8x128xf32, #tpu.memory_space<vmem>>, vector<1x8x128xf32>,
    %28 = vector.extract_strided_slice %7 {offsets = [40, 0], sizes = [8, 128], strides = [1, 1]} : vector<64x128xf32> to vector<8x128xf32>
    %c5 = arith.constant 5 : index
    %c0_18 = arith.constant 0 : index
    %c0_19 = arith.constant 0 : index
    %29 = vector.load %arg7[%c5, %c0_18, %c0_19] : memref<8x8x128xf32, #tpu.memory_space<vmem>>, vector<1x8x128xf32>
    %30 = vector.shape_cast %29 : vector<1x8x128xf32> to vector<8x128xf32>
    %31 = vector.shape_cast %28 : vector<8x128xf32> to vector<1x8x128xf32>
    tpu.vector_store %arg7[%c5, %c0_18, %c0_19], %31 {strides = array<i32>} : memref<8x8x128xf32, #tpu.memory_space<vmem>>, vector<1x8x128xf32>,
    %32 = vector.extract_strided_slice %7 {offsets = [48, 0], sizes = [8, 128], strides = [1, 1]} : vector<64x128xf32> to vector<8x128xf32>
    %c6 = arith.constant 6 : index
    %c0_20 = arith.constant 0 : index
    %c0_21 = arith.constant 0 : index
    %33 = vector.load %arg7[%c6, %c0_20, %c0_21] : memref<8x8x128xf32, #tpu.memory_space<vmem>>, vector<1x8x128xf32>
    %34 = vector.shape_cast %33 : vector<1x8x128xf32> to vector<8x128xf32>
    %35 = vector.shape_cast %32 : vector<8x128xf32> to vector<1x8x128xf32>
    tpu.vector_store %arg7[%c6, %c0_20, %c0_21], %35 {strides = array<i32>} : memref<8x8x128xf32, #tpu.memory_space<vmem>>, vector<1x8x128xf32>,
    %36 = vector.extract_strided_slice %7 {offsets = [56, 0], sizes = [8, 128], strides = [1, 1]} : vector<64x128xf32> to vector<8x128xf32>
    %c7 = arith.constant 7 : index
    %c0_22 = arith.constant 0 : index
    %c0_23 = arith.constant 0 : index
    %37 = vector.load %arg7[%c7, %c0_22, %c0_23] : memref<8x8x128xf32, #tpu.memory_space<vmem>>, vector<1x8x128xf32>
    %38 = vector.shape_cast %37 : vector<1x8x128xf32> to vector<8x128xf32>
    %39 = vector.shape_cast %36 : vector<8x128xf32> to vector<1x8x128xf32>
    tpu.vector_store %arg7[%c7, %c0_22, %c0_23], %39 {strides = array<i32>} : memref<8x8x128xf32, #tpu.memory_space<vmem>>, vector<1x8x128xf32>,
    %c0_24 = arith.constant 0 : index
    %c0_25 = arith.constant 0 : index
    %40 = vector.load %arg1[%c0_24, %c0_25] : memref<8x1xi32, #tpu.memory_space<vmem>>, vector<8x1xi32>
    %c0_26 = arith.constant 0 : index
    %c0_27 = arith.constant 0 : index
    %c0_28 = arith.constant 0 : index
    %41 = vector.load %arg4[%c0_26, %c0_27, %c0_28] : memref<1x32x128xf32, #tpu.memory_space<vmem>>, vector<1x32x128xf32>
    %42 = vector.shape_cast %41 : vector<1x32x128xf32> to vector<32x128xf32>
    %cst_29 = arith.constant 0.000000e+00 : f32
    %43 = vector.broadcast %cst_29 : f32 to vector<8x32xf32>
    %c0_i32 = arith.constant 0 : i32
    %c0_i32_30 = arith.constant 0 : i32
    %44 = arith.cmpi eq, %arg0, %c0_i32_30 : i32
    %c7_i32 = arith.constant 7 : i32
    %45 = arith.subi %c7_i32, %c0_i32 : i32
    %46 = arith.select %44, %c0_i32, %45 : i32
    %47 = arith.index_cast %46 : i32 to index
    %c0_31 = arith.constant 0 : index
    %c0_32 = arith.constant 0 : index
    %48 = vector.load %arg7[%47, %c0_31, %c0_32] : memref<8x8x128xf32, #tpu.memory_space<vmem>>, vector<1x8x128xf32>
    %49 = vector.shape_cast %48 : vector<1x8x128xf32> to vector<8x128xf32>
    %cst_33 = arith.constant dense<0.000000e+00> : vector<8x128xf32>
    %50 = tpu.matmul %43, %42, %cst_33 {dimension_numbers = #tpu.dot_dimension_numbers<[1], [0], [0], [1], [0, 0, 1, 1], [], []>} : vector<8x32xf32>, vector<32x128xf32>, vector<8x128xf32> -> vector<8x128xf32>
    %51 = arith.addf %49, %50 : vector<8x128xf32>
    %52 = vector.extract_strided_slice %51 {offsets = [0, 0], sizes = [8, 32], strides = [1, 1]} : vector<8x128xf32> to vector<8x32xf32>
    %53 = arith.negf %52 : vector<8x32xf32>
    %54 = math.exp %53 : vector<8x32xf32>
    %cst_34 = arith.constant 1.000000e+00 : f32
    %55 = vector.broadcast %cst_34 : f32 to vector<8x32xf32>
    %56 = arith.addf %55, %54 : vector<8x32xf32>
    %57 = arith.divf %55, %56 : vector<8x32xf32>
    %58 = vector.extract_strided_slice %51 {offsets = [0, 32], sizes = [8, 32], strides = [1, 1]} : vector<8x128xf32> to vector<8x32xf32>
    %59 = arith.negf %58 : vector<8x32xf32>
    %60 = math.exp %59 : vector<8x32xf32>
    %cst_35 = arith.constant 1.000000e+00 : f32
    %61 = vector.broadcast %cst_35 : f32 to vector<8x32xf32>
    %62 = arith.addf %61, %60 : vector<8x32xf32>
    %63 = arith.divf %61, %62 : vector<8x32xf32>
    %64 = vector.extract_strided_slice %51 {offsets = [0, 64], sizes = [8, 32], strides = [1, 1]} : vector<8x128xf32> to vector<8x32xf32>
    %65 = math.tanh %64 : vector<8x32xf32>
    %66 = vector.extract_strided_slice %51 {offsets = [0, 96], sizes = [8, 32], strides = [1, 1]} : vector<8x128xf32> to vector<8x32xf32>
    %67 = arith.negf %66 : vector<8x32xf32>
    %68 = math.exp %67 : vector<8x32xf32>
    %cst_36 = arith.constant 1.000000e+00 : f32
    %69 = vector.broadcast %cst_36 : f32 to vector<8x32xf32>
    %70 = arith.addf %69, %68 : vector<8x32xf32>
    %71 = arith.divf %69, %70 : vector<8x32xf32>
    %72 = arith.mulf %63, %43 : vector<8x32xf32>
    %73 = arith.mulf %57, %65 : vector<8x32xf32>
    %74 = arith.addf %72, %73 : vector<8x32xf32>
    %75 = math.tanh %74 : vector<8x32xf32>
    %76 = arith.mulf %71, %75 : vector<8x32xf32>
    %77 = vector.broadcast %46 : i32 to vector<8x1xi32>
    %78 = arith.cmpi slt, %77, %40 : vector<8x1xi32>
    %79 = vector.shape_cast %78 : vector<8x1xi1> to vector<8x1xi1>
    %80 = vector.broadcast %79 : vector<8x1xi1> to vector<8x32xi1>
    %81 = arith.select %80, %76, %43 : vector<8x32xi1>, vector<8x32xf32>
    %82 = vector.shape_cast %78 : vector<8x1xi1> to vector<8x1xi1>
    %83 = vector.broadcast %82 : vector<8x1xi1> to vector<8x32xi1>
    %84 = arith.select %83, %74, %43 : vector<8x32xi1>, vector<8x32xf32>
    %c1_i32 = arith.constant 1 : i32
    %c0_i32_37 = arith.constant 0 : i32
    %85 = arith.cmpi eq, %arg0, %c0_i32_37 : i32
    %c7_i32_38 = arith.constant 7 : i32
    %86 = arith.subi %c7_i32_38, %c1_i32 : i32
    %87 = arith.select %85, %c1_i32, %86 : i32
    %88 = arith.index_cast %87 : i32 to index
    %c0_39 = arith.constant 0 : index
    %c0_40 = arith.constant 0 : index
    %89 = vector.load %arg7[%88, %c0_39, %c0_40] : memref<8x8x128xf32, #tpu.memory_space<vmem>>, vector<1x8x128xf32>
    %90 = vector.shape_cast %89 : vector<1x8x128xf32> to vector<8x128xf32>
    %cst_41 = arith.constant dense<0.000000e+00> : vector<8x128xf32>
    %91 = tpu.matmul %81, %42, %cst_41 {dimension_numbers = #tpu.dot_dimension_numbers<[1], [0], [0], [1], [0, 0, 1, 1], [], []>} : vector<8x32xf32>, vector<32x128xf32>, vector<8x128xf32> -> vector<8x128xf32>
    %92 = arith.addf %90, %91 : vector<8x128xf32>
    %93 = vector.extract_strided_slice %92 {offsets = [0, 0], sizes = [8, 32], strides = [1, 1]} : vector<8x128xf32> to vector<8x32xf32>
    %94 = arith.negf %93 : vector<8x32xf32>
    %95 = math.exp %94 : vector<8x32xf32>
    %cst_42 = arith.constant 1.000000e+00 : f32
    %96 = vector.broadcast %cst_42 : f32 to vector<8x32xf32>
    %97 = arith.addf %96, %95 : vector<8x32xf32>
    %98 = arith.divf %96, %97 : vector<8x32xf32>
    %99 = vector.extract_strided_slice %92 {offsets = [0, 32], sizes = [8, 32], strides = [1, 1]} : vector<8x128xf32> to vector<8x32xf32>
    %100 = arith.negf %99 : vector<8x32xf32>
    %101 = math.exp %100 : vector<8x32xf32>
    %cst_43 = arith.constant 1.000000e+00 : f32
    %102 = vector.broadcast %cst_43 : f32 to vector<8x32xf32>
    %103 = arith.addf %102, %101 : vector<8x32xf32>
    %104 = arith.divf %102, %103 : vector<8x32xf32>
    %105 = vector.extract_strided_slice %92 {offsets = [0, 64], sizes = [8, 32], strides = [1, 1]} : vector<8x128xf32> to vector<8x32xf32>
    %106 = math.tanh %105 : vector<8x32xf32>
    %107 = vector.extract_strided_slice %92 {offsets = [0, 96], sizes = [8, 32], strides = [1, 1]} : vector<8x128xf32> to vector<8x32xf32>
    %108 = arith.negf %107 : vector<8x32xf32>
    %109 = math.exp %108 : vector<8x32xf32>
    %cst_44 = arith.constant 1.000000e+00 : f32
    %110 = vector.broadcast %cst_44 : f32 to vector<8x32xf32>
    %111 = arith.addf %110, %109 : vector<8x32xf32>
    %112 = arith.divf %110, %111 : vector<8x32xf32>
    %113 = arith.mulf %104, %84 : vector<8x32xf32>
    %114 = arith.mulf %98, %106 : vector<8x32xf32>
    %115 = arith.addf %113, %114 : vector<8x32xf32>
    %116 = math.tanh %115 : vector<8x32xf32>
    %117 = arith.mulf %112, %116 : vector<8x32xf32>
    %118 = vector.broadcast %87 : i32 to vector<8x1xi32>
    %119 = arith.cmpi slt, %118, %40 : vector<8x1xi32>
    %120 = vector.shape_cast %119 : vector<8x1xi1> to vector<8x1xi1>
    %121 = vector.broadcast %120 : vector<8x1xi1> to vector<8x32xi1>
    %122 = arith.select %121, %117, %81 : vector<8x32xi1>, vector<8x32xf32>
    %123 = vector.shape_cast %119 : vector<8x1xi1> to vector<8x1xi1>
    %124 = vector.broadcast %123 : vector<8x1xi1> to vector<8x32xi1>
    %125 = arith.select %124, %115, %84 : vector<8x32xi1>, vector<8x32xf32>
    %c2_i32 = arith.constant 2 : i32
    %c0_i32_45 = arith.constant 0 : i32
    %126 = arith.cmpi eq, %arg0, %c0_i32_45 : i32
    %c7_i32_46 = arith.constant 7 : i32
    %127 = arith.subi %c7_i32_46, %c2_i32 : i32
    %128 = arith.select %126, %c2_i32, %127 : i32
    %129 = arith.index_cast %128 : i32 to index
    %c0_47 = arith.constant 0 : index
    %c0_48 = arith.constant 0 : index
    %130 = vector.load %arg7[%129, %c0_47, %c0_48] : memref<8x8x128xf32, #tpu.memory_space<vmem>>, vector<1x8x128xf32>
    %131 = vector.shape_cast %130 : vector<1x8x128xf32> to vector<8x128xf32>
    %cst_49 = arith.constant dense<0.000000e+00> : vector<8x128xf32>
    %132 = tpu.matmul %122, %42, %cst_49 {dimension_numbers = #tpu.dot_dimension_numbers<[1], [0], [0], [1], [0, 0, 1, 1], [], []>} : vector<8x32xf32>, vector<32x128xf32>, vector<8x128xf32> -> vector<8x128xf32>
    %133 = arith.addf %131, %132 : vector<8x128xf32>
    %134 = vector.extract_strided_slice %133 {offsets = [0, 0], sizes = [8, 32], strides = [1, 1]} : vector<8x128xf32> to vector<8x32xf32>
    %135 = arith.negf %134 : vector<8x32xf32>
    %136 = math.exp %135 : vector<8x32xf32>
    %cst_50 = arith.constant 1.000000e+00 : f32
    %137 = vector.broadcast %cst_50 : f32 to vector<8x32xf32>
    %138 = arith.addf %137, %136 : vector<8x32xf32>
    %139 = arith.divf %137, %138 : vector<8x32xf32>
    %140 = vector.extract_strided_slice %133 {offsets = [0, 32], sizes = [8, 32], strides = [1, 1]} : vector<8x128xf32> to vector<8x32xf32>
    %141 = arith.negf %140 : vector<8x32xf32>
    %142 = math.exp %141 : vector<8x32xf32>
    %cst_51 = arith.constant 1.000000e+00 : f32
    %143 = vector.broadcast %cst_51 : f32 to vector<8x32xf32>
    %144 = arith.addf %143, %142 : vector<8x32xf32>
    %145 = arith.divf %143, %144 : vector<8x32xf32>
    %146 = vector.extract_strided_slice %133 {offsets = [0, 64], sizes = [8, 32], strides = [1, 1]} : vector<8x128xf32> to vector<8x32xf32>
    %147 = math.tanh %146 : vector<8x32xf32>
    %148 = vector.extract_strided_slice %133 {offsets = [0, 96], sizes = [8, 32], strides = [1, 1]} : vector<8x128xf32> to vector<8x32xf32>
    %149 = arith.negf %148 : vector<8x32xf32>
    %150 = math.exp %149 : vector<8x32xf32>
    %cst_52 = arith.constant 1.000000e+00 : f32
    %151 = vector.broadcast %cst_52 : f32 to vector<8x32xf32>
    %152 = arith.addf %151, %150 : vector<8x32xf32>
    %153 = arith.divf %151, %152 : vector<8x32xf32>
    %154 = arith.mulf %145, %125 : vector<8x32xf32>
    %155 = arith.mulf %139, %147 : vector<8x32xf32>
    %156 = arith.addf %154, %155 : vector<8x32xf32>
    %157 = math.tanh %156 : vector<8x32xf32>
    %158 = arith.mulf %153, %157 : vector<8x32xf32>
    %159 = vector.broadcast %128 : i32 to vector<8x1xi32>
    %160 = arith.cmpi slt, %159, %40 : vector<8x1xi32>
    %161 = vector.shape_cast %160 : vector<8x1xi1> to vector<8x1xi1>
    %162 = vector.broadcast %161 : vector<8x1xi1> to vector<8x32xi1>
    %163 = arith.select %162, %158, %122 : vector<8x32xi1>, vector<8x32xf32>
    %164 = vector.shape_cast %160 : vector<8x1xi1> to vector<8x1xi1>
    %165 = vector.broadcast %164 : vector<8x1xi1> to vector<8x32xi1>
    %166 = arith.select %165, %156, %125 : vector<8x32xi1>, vector<8x32xf32>
    %c3_i32 = arith.constant 3 : i32
    %c0_i32_53 = arith.constant 0 : i32
    %167 = arith.cmpi eq, %arg0, %c0_i32_53 : i32
    %c7_i32_54 = arith.constant 7 : i32
    %168 = arith.subi %c7_i32_54, %c3_i32 : i32
    %169 = arith.select %167, %c3_i32, %168 : i32
    %170 = arith.index_cast %169 : i32 to index
    %c0_55 = arith.constant 0 : index
    %c0_56 = arith.constant 0 : index
    %171 = vector.load %arg7[%170, %c0_55, %c0_56] : memref<8x8x128xf32, #tpu.memory_space<vmem>>, vector<1x8x128xf32>
    %172 = vector.shape_cast %171 : vector<1x8x128xf32> to vector<8x128xf32>
    %cst_57 = arith.constant dense<0.000000e+00> : vector<8x128xf32>
    %173 = tpu.matmul %163, %42, %cst_57 {dimension_numbers = #tpu.dot_dimension_numbers<[1], [0], [0], [1], [0, 0, 1, 1], [], []>} : vector<8x32xf32>, vector<32x128xf32>, vector<8x128xf32> -> vector<8x128xf32>
    %174 = arith.addf %172, %173 : vector<8x128xf32>
    %175 = vector.extract_strided_slice %174 {offsets = [0, 0], sizes = [8, 32], strides = [1, 1]} : vector<8x128xf32> to vector<8x32xf32>
    %176 = arith.negf %175 : vector<8x32xf32>
    %177 = math.exp %176 : vector<8x32xf32>
    %cst_58 = arith.constant 1.000000e+00 : f32
    %178 = vector.broadcast %cst_58 : f32 to vector<8x32xf32>
    %179 = arith.addf %178, %177 : vector<8x32xf32>
    %180 = arith.divf %178, %179 : vector<8x32xf32>
    %181 = vector.extract_strided_slice %174 {offsets = [0, 32], sizes = [8, 32], strides = [1, 1]} : vector<8x128xf32> to vector<8x32xf32>
    %182 = arith.negf %181 : vector<8x32xf32>
    %183 = math.exp %182 : vector<8x32xf32>
    %cst_59 = arith.constant 1.000000e+00 : f32
    %184 = vector.broadcast %cst_59 : f32 to vector<8x32xf32>
    %185 = arith.addf %184, %183 : vector<8x32xf32>
    %186 = arith.divf %184, %185 : vector<8x32xf32>
    %187 = vector.extract_strided_slice %174 {offsets = [0, 64], sizes = [8, 32], strides = [1, 1]} : vector<8x128xf32> to vector<8x32xf32>
    %188 = math.tanh %187 : vector<8x32xf32>
    %189 = vector.extract_strided_slice %174 {offsets = [0, 96], sizes = [8, 32], strides = [1, 1]} : vector<8x128xf32> to vector<8x32xf32>
    %190 = arith.negf %189 : vector<8x32xf32>
    %191 = math.exp %190 : vector<8x32xf32>
    %cst_60 = arith.constant 1.000000e+00 : f32
    %192 = vector.broadcast %cst_60 : f32 to vector<8x32xf32>
    %193 = arith.addf %192, %191 : vector<8x32xf32>
    %194 = arith.divf %192, %193 : vector<8x32xf32>
    %195 = arith.mulf %186, %166 : vector<8x32xf32>
    %196 = arith.mulf %180, %188 : vector<8x32xf32>
    %197 = arith.addf %195, %196 : vector<8x32xf32>
    %198 = math.tanh %197 : vector<8x32xf32>
    %199 = arith.mulf %194, %198 : vector<8x32xf32>
    %200 = vector.broadcast %169 : i32 to vector<8x1xi32>
    %201 = arith.cmpi slt, %200, %40 : vector<8x1xi32>
    %202 = vector.shape_cast %201 : vector<8x1xi1> to vector<8x1xi1>
    %203 = vector.broadcast %202 : vector<8x1xi1> to vector<8x32xi1>
    %204 = arith.select %203, %199, %163 : vector<8x32xi1>, vector<8x32xf32>
    %205 = vector.shape_cast %201 : vector<8x1xi1> to vector<8x1xi1>
    %206 = vector.broadcast %205 : vector<8x1xi1> to vector<8x32xi1>
    %207 = arith.select %206, %197, %166 : vector<8x32xi1>, vector<8x32xf32>
    %c4_i32 = arith.constant 4 : i32
    %c0_i32_61 = arith.constant 0 : i32
    %208 = arith.cmpi eq, %arg0, %c0_i32_61 : i32
    %c7_i32_62 = arith.constant 7 : i32
    %209 = arith.subi %c7_i32_62, %c4_i32 : i32
    %210 = arith.select %208, %c4_i32, %209 : i32
    %211 = arith.index_cast %210 : i32 to index
    %c0_63 = arith.constant 0 : index
    %c0_64 = arith.constant 0 : index
    %212 = vector.load %arg7[%211, %c0_63, %c0_64] : memref<8x8x128xf32, #tpu.memory_space<vmem>>, vector<1x8x128xf32>
    %213 = vector.shape_cast %212 : vector<1x8x128xf32> to vector<8x128xf32>
    %cst_65 = arith.constant dense<0.000000e+00> : vector<8x128xf32>
    %214 = tpu.matmul %204, %42, %cst_65 {dimension_numbers = #tpu.dot_dimension_numbers<[1], [0], [0], [1], [0, 0, 1, 1], [], []>} : vector<8x32xf32>, vector<32x128xf32>, vector<8x128xf32> -> vector<8x128xf32>
    %215 = arith.addf %213, %214 : vector<8x128xf32>
    %216 = vector.extract_strided_slice %215 {offsets = [0, 0], sizes = [8, 32], strides = [1, 1]} : vector<8x128xf32> to vector<8x32xf32>
    %217 = arith.negf %216 : vector<8x32xf32>
    %218 = math.exp %217 : vector<8x32xf32>
    %cst_66 = arith.constant 1.000000e+00 : f32
    %219 = vector.broadcast %cst_66 : f32 to vector<8x32xf32>
    %220 = arith.addf %219, %218 : vector<8x32xf32>
    %221 = arith.divf %219, %220 : vector<8x32xf32>
    %222 = vector.extract_strided_slice %215 {offsets = [0, 32], sizes = [8, 32], strides = [1, 1]} : vector<8x128xf32> to vector<8x32xf32>
    %223 = arith.negf %222 : vector<8x32xf32>
    %224 = math.exp %223 : vector<8x32xf32>
    %cst_67 = arith.constant 1.000000e+00 : f32
    %225 = vector.broadcast %cst_67 : f32 to vector<8x32xf32>
    %226 = arith.addf %225, %224 : vector<8x32xf32>
    %227 = arith.divf %225, %226 : vector<8x32xf32>
    %228 = vector.extract_strided_slice %215 {offsets = [0, 64], sizes = [8, 32], strides = [1, 1]} : vector<8x128xf32> to vector<8x32xf32>
    %229 = math.tanh %228 : vector<8x32xf32>
    %230 = vector.extract_strided_slice %215 {offsets = [0, 96], sizes = [8, 32], strides = [1, 1]} : vector<8x128xf32> to vector<8x32xf32>
    %231 = arith.negf %230 : vector<8x32xf32>
    %232 = math.exp %231 : vector<8x32xf32>
    %cst_68 = arith.constant 1.000000e+00 : f32
    %233 = vector.broadcast %cst_68 : f32 to vector<8x32xf32>
    %234 = arith.addf %233, %232 : vector<8x32xf32>
    %235 = arith.divf %233, %234 : vector<8x32xf32>
    %236 = arith.mulf %227, %207 : vector<8x32xf32>
    %237 = arith.mulf %221, %229 : vector<8x32xf32>
    %238 = arith.addf %236, %237 : vector<8x32xf32>
    %239 = math.tanh %238 : vector<8x32xf32>
    %240 = arith.mulf %235, %239 : vector<8x32xf32>
    %241 = vector.broadcast %210 : i32 to vector<8x1xi32>
    %242 = arith.cmpi slt, %241, %40 : vector<8x1xi32>
    %243 = vector.shape_cast %242 : vector<8x1xi1> to vector<8x1xi1>
    %244 = vector.broadcast %243 : vector<8x1xi1> to vector<8x32xi1>
    %245 = arith.select %244, %240, %204 : vector<8x32xi1>, vector<8x32xf32>
    %246 = vector.shape_cast %242 : vector<8x1xi1> to vector<8x1xi1>
    %247 = vector.broadcast %246 : vector<8x1xi1> to vector<8x32xi1>
    %248 = arith.select %247, %238, %207 : vector<8x32xi1>, vector<8x32xf32>
    %c5_i32 = arith.constant 5 : i32
    %c0_i32_69 = arith.constant 0 : i32
    %249 = arith.cmpi eq, %arg0, %c0_i32_69 : i32
    %c7_i32_70 = arith.constant 7 : i32
    %250 = arith.subi %c7_i32_70, %c5_i32 : i32
    %251 = arith.select %249, %c5_i32, %250 : i32
    %252 = arith.index_cast %251 : i32 to index
    %c0_71 = arith.constant 0 : index
    %c0_72 = arith.constant 0 : index
    %253 = vector.load %arg7[%252, %c0_71, %c0_72] : memref<8x8x128xf32, #tpu.memory_space<vmem>>, vector<1x8x128xf32>
    %254 = vector.shape_cast %253 : vector<1x8x128xf32> to vector<8x128xf32>
    %cst_73 = arith.constant dense<0.000000e+00> : vector<8x128xf32>
    %255 = tpu.matmul %245, %42, %cst_73 {dimension_numbers = #tpu.dot_dimension_numbers<[1], [0], [0], [1], [0, 0, 1, 1], [], []>} : vector<8x32xf32>, vector<32x128xf32>, vector<8x128xf32> -> vector<8x128xf32>
    %256 = arith.addf %254, %255 : vector<8x128xf32>
    %257 = vector.extract_strided_slice %256 {offsets = [0, 0], sizes = [8, 32], strides = [1, 1]} : vector<8x128xf32> to vector<8x32xf32>
    %258 = arith.negf %257 : vector<8x32xf32>
    %259 = math.exp %258 : vector<8x32xf32>
    %cst_74 = arith.constant 1.000000e+00 : f32
    %260 = vector.broadcast %cst_74 : f32 to vector<8x32xf32>
    %261 = arith.addf %260, %259 : vector<8x32xf32>
    %262 = arith.divf %260, %261 : vector<8x32xf32>
    %263 = vector.extract_strided_slice %256 {offsets = [0, 32], sizes = [8, 32], strides = [1, 1]} : vector<8x128xf32> to vector<8x32xf32>
    %264 = arith.negf %263 : vector<8x32xf32>
    %265 = math.exp %264 : vector<8x32xf32>
    %cst_75 = arith.constant 1.000000e+00 : f32
    %266 = vector.broadcast %cst_75 : f32 to vector<8x32xf32>
    %267 = arith.addf %266, %265 : vector<8x32xf32>
    %268 = arith.divf %266, %267 : vector<8x32xf32>
    %269 = vector.extract_strided_slice %256 {offsets = [0, 64], sizes = [8, 32], strides = [1, 1]} : vector<8x128xf32> to vector<8x32xf32>
    %270 = math.tanh %269 : vector<8x32xf32>
    %271 = vector.extract_strided_slice %256 {offsets = [0, 96], sizes = [8, 32], strides = [1, 1]} : vector<8x128xf32> to vector<8x32xf32>
    %272 = arith.negf %271 : vector<8x32xf32>
    %273 = math.exp %272 : vector<8x32xf32>
    %cst_76 = arith.constant 1.000000e+00 : f32
    %274 = vector.broadcast %cst_76 : f32 to vector<8x32xf32>
    %275 = arith.addf %274, %273 : vector<8x32xf32>
    %276 = arith.divf %274, %275 : vector<8x32xf32>
    %277 = arith.mulf %268, %248 : vector<8x32xf32>
    %278 = arith.mulf %262, %270 : vector<8x32xf32>
    %279 = arith.addf %277, %278 : vector<8x32xf32>
    %280 = math.tanh %279 : vector<8x32xf32>
    %281 = arith.mulf %276, %280 : vector<8x32xf32>
    %282 = vector.broadcast %251 : i32 to vector<8x1xi32>
    %283 = arith.cmpi slt, %282, %40 : vector<8x1xi32>
    %284 = vector.shape_cast %283 : vector<8x1xi1> to vector<8x1xi1>
    %285 = vector.broadcast %284 : vector<8x1xi1> to vector<8x32xi1>
    %286 = arith.select %285, %281, %245 : vector<8x32xi1>, vector<8x32xf32>
    %287 = vector.shape_cast %283 : vector<8x1xi1> to vector<8x1xi1>
    %288 = vector.broadcast %287 : vector<8x1xi1> to vector<8x32xi1>
    %289 = arith.select %288, %279, %248 : vector<8x32xi1>, vector<8x32xf32>
    %c6_i32 = arith.constant 6 : i32
    %c0_i32_77 = arith.constant 0 : i32
    %290 = arith.cmpi eq, %arg0, %c0_i32_77 : i32
    %c7_i32_78 = arith.constant 7 : i32
    %291 = arith.subi %c7_i32_78, %c6_i32 : i32
    %292 = arith.select %290, %c6_i32, %291 : i32
    %293 = arith.index_cast %292 : i32 to index
    %c0_79 = arith.constant 0 : index
    %c0_80 = arith.constant 0 : index
    %294 = vector.load %arg7[%293, %c0_79, %c0_80] : memref<8x8x128xf32, #tpu.memory_space<vmem>>, vector<1x8x128xf32>
    %295 = vector.shape_cast %294 : vector<1x8x128xf32> to vector<8x128xf32>
    %cst_81 = arith.constant dense<0.000000e+00> : vector<8x128xf32>
    %296 = tpu.matmul %286, %42, %cst_81 {dimension_numbers = #tpu.dot_dimension_numbers<[1], [0], [0], [1], [0, 0, 1, 1], [], []>} : vector<8x32xf32>, vector<32x128xf32>, vector<8x128xf32> -> vector<8x128xf32>
    %297 = arith.addf %295, %296 : vector<8x128xf32>
    %298 = vector.extract_strided_slice %297 {offsets = [0, 0], sizes = [8, 32], strides = [1, 1]} : vector<8x128xf32> to vector<8x32xf32>
    %299 = arith.negf %298 : vector<8x32xf32>
    %300 = math.exp %299 : vector<8x32xf32>
    %cst_82 = arith.constant 1.000000e+00 : f32
    %301 = vector.broadcast %cst_82 : f32 to vector<8x32xf32>
    %302 = arith.addf %301, %300 : vector<8x32xf32>
    %303 = arith.divf %301, %302 : vector<8x32xf32>
    %304 = vector.extract_strided_slice %297 {offsets = [0, 32], sizes = [8, 32], strides = [1, 1]} : vector<8x128xf32> to vector<8x32xf32>
    %305 = arith.negf %304 : vector<8x32xf32>
    %306 = math.exp %305 : vector<8x32xf32>
    %cst_83 = arith.constant 1.000000e+00 : f32
    %307 = vector.broadcast %cst_83 : f32 to vector<8x32xf32>
    %308 = arith.addf %307, %306 : vector<8x32xf32>
    %309 = arith.divf %307, %308 : vector<8x32xf32>
    %310 = vector.extract_strided_slice %297 {offsets = [0, 64], sizes = [8, 32], strides = [1, 1]} : vector<8x128xf32> to vector<8x32xf32>
    %311 = math.tanh %310 : vector<8x32xf32>
    %312 = vector.extract_strided_slice %297 {offsets = [0, 96], sizes = [8, 32], strides = [1, 1]} : vector<8x128xf32> to vector<8x32xf32>
    %313 = arith.negf %312 : vector<8x32xf32>
    %314 = math.exp %313 : vector<8x32xf32>
    %cst_84 = arith.constant 1.000000e+00 : f32
    %315 = vector.broadcast %cst_84 : f32 to vector<8x32xf32>
    %316 = arith.addf %315, %314 : vector<8x32xf32>
    %317 = arith.divf %315, %316 : vector<8x32xf32>
    %318 = arith.mulf %309, %289 : vector<8x32xf32>
    %319 = arith.mulf %303, %311 : vector<8x32xf32>
    %320 = arith.addf %318, %319 : vector<8x32xf32>
    %321 = math.tanh %320 : vector<8x32xf32>
    %322 = arith.mulf %317, %321 : vector<8x32xf32>
    %323 = vector.broadcast %292 : i32 to vector<8x1xi32>
    %324 = arith.cmpi slt, %323, %40 : vector<8x1xi32>
    %325 = vector.shape_cast %324 : vector<8x1xi1> to vector<8x1xi1>
    %326 = vector.broadcast %325 : vector<8x1xi1> to vector<8x32xi1>
    %327 = arith.select %326, %322, %286 : vector<8x32xi1>, vector<8x32xf32>
    %328 = vector.shape_cast %324 : vector<8x1xi1> to vector<8x1xi1>
    %329 = vector.broadcast %328 : vector<8x1xi1> to vector<8x32xi1>
    %330 = arith.select %329, %320, %289 : vector<8x32xi1>, vector<8x32xf32>
    %c7_i32_85 = arith.constant 7 : i32
    %c0_i32_86 = arith.constant 0 : i32
    %331 = arith.cmpi eq, %arg0, %c0_i32_86 : i32
    %c7_i32_87 = arith.constant 7 : i32
    %332 = arith.subi %c7_i32_87, %c7_i32_85 : i32
    %333 = arith.select %331, %c7_i32_85, %332 : i32
    %334 = arith.index_cast %333 : i32 to index
    %c0_88 = arith.constant 0 : index
    %c0_89 = arith.constant 0 : index
    %335 = vector.load %arg7[%334, %c0_88, %c0_89] : memref<8x8x128xf32, #tpu.memory_space<vmem>>, vector<1x8x128xf32>
    %336 = vector.shape_cast %335 : vector<1x8x128xf32> to vector<8x128xf32>
    %cst_90 = arith.constant dense<0.000000e+00> : vector<8x128xf32>
    %337 = tpu.matmul %327, %42, %cst_90 {dimension_numbers = #tpu.dot_dimension_numbers<[1], [0], [0], [1], [0, 0, 1, 1], [], []>} : vector<8x32xf32>, vector<32x128xf32>, vector<8x128xf32> -> vector<8x128xf32>
    %338 = arith.addf %336, %337 : vector<8x128xf32>
    %339 = vector.extract_strided_slice %338 {offsets = [0, 0], sizes = [8, 32], strides = [1, 1]} : vector<8x128xf32> to vector<8x32xf32>
    %340 = arith.negf %339 : vector<8x32xf32>
    %341 = math.exp %340 : vector<8x32xf32>
    %cst_91 = arith.constant 1.000000e+00 : f32
    %342 = vector.broadcast %cst_91 : f32 to vector<8x32xf32>
    %343 = arith.addf %342, %341 : vector<8x32xf32>
    %344 = arith.divf %342, %343 : vector<8x32xf32>
    %345 = vector.extract_strided_slice %338 {offsets = [0, 32], sizes = [8, 32], strides = [1, 1]} : vector<8x128xf32> to vector<8x32xf32>
    %346 = arith.negf %345 : vector<8x32xf32>
    %347 = math.exp %346 : vector<8x32xf32>
    %cst_92 = arith.constant 1.000000e+00 : f32
    %348 = vector.broadcast %cst_92 : f32 to vector<8x32xf32>
    %349 = arith.addf %348, %347 : vector<8x32xf32>
    %350 = arith.divf %348, %349 : vector<8x32xf32>
    %351 = vector.extract_strided_slice %338 {offsets = [0, 64], sizes = [8, 32], strides = [1, 1]} : vector<8x128xf32> to vector<8x32xf32>
    %352 = math.tanh %351 : vector<8x32xf32>
    %353 = vector.extract_strided_slice %338 {offsets = [0, 96], sizes = [8, 32], strides = [1, 1]} : vector<8x128xf32> to vector<8x32xf32>
    %354 = arith.negf %353 : vector<8x32xf32>
    %355 = math.exp %354 : vector<8x32xf32>
    %cst_93 = arith.constant 1.000000e+00 : f32
    %356 = vector.broadcast %cst_93 : f32 to vector<8x32xf32>
    %357 = arith.addf %356, %355 : vector<8x32xf32>
    %358 = arith.divf %356, %357 : vector<8x32xf32>
    %359 = arith.mulf %350, %330 : vector<8x32xf32>
    %360 = arith.mulf %344, %352 : vector<8x32xf32>
    %361 = arith.addf %359, %360 : vector<8x32xf32>
    %362 = math.tanh %361 : vector<8x32xf32>
    %363 = arith.mulf %358, %362 : vector<8x32xf32>
    %364 = vector.broadcast %333 : i32 to vector<8x1xi32>
    %365 = arith.cmpi slt, %364, %40 : vector<8x1xi32>
    %366 = vector.shape_cast %365 : vector<8x1xi1> to vector<8x1xi1>
    %367 = vector.broadcast %366 : vector<8x1xi1> to vector<8x32xi1>
    %368 = arith.select %367, %363, %327 : vector<8x32xi1>, vector<8x32xf32>
    %369 = vector.shape_cast %365 : vector<8x1xi1> to vector<8x1xi1>
    %370 = vector.broadcast %369 : vector<8x1xi1> to vector<8x32xi1>
    %371 = arith.select %370, %361, %330 : vector<8x32xi1>, vector<8x32xf32>
    %c8_i32 = arith.constant 8 : i32
    %c0_94 = arith.constant 0 : index
    %c0_95 = arith.constant 0 : index
    %c0_96 = arith.constant 0 : index
    %372 = vector.load %arg6[%c0_94, %c0_95, %c0_96] : memref<1x8x32xf32, #tpu.memory_space<vmem>>, vector<1x8x32xf32>
    %373 = vector.shape_cast %372 : vector<1x8x32xf32> to vector<8x32xf32>
    %374 = vector.shape_cast %368 : vector<8x32xf32> to vector<1x8x32xf32>
    tpu.vector_store %arg6[%c0_94, %c0_95, %c0_96], %374 {strides = array<i32>} : memref<1x8x32xf32, #tpu.memory_space<vmem>>, vector<1x8x32xf32>,
    return
  }
  func.func @transform_0(%arg0: i32) -> (i32, i32) {
    %c0_i32 = arith.constant 0 : i32
    %c0_i32_0 = arith.constant 0 : i32
    %c0_i32_1 = arith.constant 0 : i32
    return %c0_i32, %c0_i32_0 : i32, i32
  }
  func.func @transform_1(%arg0: i32) -> (i32, i32) {
    %c0_i32 = arith.constant 0 : i32
    %c0_i32_0 = arith.constant 0 : i32
    %c0_i32_1 = arith.constant 0 : i32
    return %c0_i32, %c0_i32_0 : i32, i32
  }
  func.func @transform_2(%arg0: i32) -> (i32, i32, i32) {
    %c0_i32 = arith.constant 0 : i32
    %c0_i32_0 = arith.constant 0 : i32
    %c0_i32_1 = arith.constant 0 : i32
    return %arg0, %c0_i32, %c0_i32_0 : i32, i32, i32
  }
  func.func @transform_3(%arg0: i32) -> (i32, i32, i32) {
    %c0_i32 = arith.constant 0 : i32
    %c0_i32_0 = arith.constant 0 : i32
    %c0_i32_1 = arith.constant 0 : i32
    return %arg0, %c0_i32, %c0_i32_0 : i32, i32, i32
  }
  func.func @transform_4(%arg0: i32) -> (i32, i32, i32) {
    %c0_i32 = arith.constant 0 : i32
    %c0_i32_0 = arith.constant 0 : i32
    %c0_i32_1 = arith.constant 0 : i32
    return %arg0, %c0_i32, %c0_i32_0 : i32, i32, i32
  }
  func.func @transform_5(%arg0: i32) -> (i32, i32, i32) {
    %c0_i32 = arith.constant 0 : i32
    %c0_i32_0 = arith.constant 0 : i32
    %c0_i32_1 = arith.constant 0 : i32
    return %arg0, %c0_i32, %c0_i32_0 : i32, i32, i32
  }
}

</mosaic_0001>

<llo_original>
// kernel: question_encoder_forward.1
$region0: #{question_encoder_forward.1}
  #allocation0 [shape = 'u32[]', space=smem, size = 0x4, offset = 0x4, fixed_abs, tag = 'smem constant byte address 0x4 - core index']
  #allocation1 [shape = 'u32[144,128]{1,0:T(1,128)}', space=vmem, size = 0x12000, scoped, tag = 'internal scratch']
  #allocation2 [shape = 'f32[8,8,128]{2,1,0:T(8,128)}', space=vmem, size = 0x8000, scoped, tag = 'scratch operand']
  %s0 = inlined_call_operand.vmem [shape: s32[8,1], index: 0, kind: input, shape index: {}]
  %s1 = inlined_call_operand.vmem [shape: f32[64,32], index: 1, kind: input, shape index: {}]
  %s2 = inlined_call_operand.vmem [shape: f32[2,32,128], index: 2, kind: input, shape index: {}]
  %s3 = inlined_call_operand.vmem [shape: f32[2,32,128], index: 3, kind: input, shape index: {}]
  %s4 = inlined_call_operand.vmem [shape: f32[2,1,128], index: 4, kind: input, shape index: {}]
  %s5 = inlined_call_operand.vmem [shape: f32[2,8,32], index: 5, kind: output, shape index: {}]
  %s6 = sld [smem:[#allocation0]]
  $region53: #{question_encoder_forward.1} parent=0
    _
  %s8 = ssub.s32 1, %s6
  %s9 = scalar_select 0, %s8, %s6
  loop: start=0, step=1, limit=4
  $region2: #{question_encoder_forward.1} parent=0 // loop_pre_header
    _
  $region3: #{question_encoder_forward.1} parent=0 // loop_header
    %s11 = sphi 0, %s15
    %p12 = scmp.ge.s32.totalorder %s11, 4
    %s19 = sphi 0, %s19
    %s21 = sphi 0, %s19
    %s22 = sphi 0, %s21
    %s36 = sphi 0, %s22
    %s40 = sphi 0, %s40
    %s42 = sphi 0, %s40
    %s43 = sphi 0, %s42
    %s57 = sphi 0, %s43
    %s63 = sphi 0, %s65
    %s66 = sphi 0, %s63
    %s67 = sphi 0, %s66
    %s83 = sphi 0, %s67
    %s89 = sphi 0, %s91
    %s92 = sphi 0, %s89
    %s93 = sphi 0, %s92
    %s109 = sphi 0, %s93
    %s115 = sphi 0, %s117
    %s118 = sphi 0, %s115
    %s119 = sphi 0, %s118
    %s135 = sphi 0, %s119
    %s141 = sphi 0, %s143
    %s144 = sphi 0, %s141
    %s145 = sphi 0, %s144
    %s161 = sphi 0, %s145
  $region4: #{question_encoder_forward.1} parent=0 // loop_header_branch
    %14 = sbr.rel (%p12) target = $region8
  $region5: #{question_encoder_forward.1} parent=0 // loop_body
    %s16 = ssub.s32 %s11, 1
    %s17 = ssub.s32 %s11, 2
    %s18 = sadd.s32 %s11, 1
    %s20 = sadd.s32 %s19, 1
    %p23 = scmp.eq.s32.totalorder %s11, 1
    %p24 = scmp.ne.s32.totalorder %s19, %s21
    %p25 = scmp.eq.s32.totalorder %s11, 0
    %p26 = por %p24, %p25
    %p27 = scmp.ne.s32.totalorder %s19, %s21
    %p28 = scmp.eq.s32.totalorder %s16, 1
    %p29 = por %p27, %p28
    %p30 = scmp.ne.s32.totalorder %s21, %s22
    %p31 = scmp.eq.s32.totalorder %s16, 0
    %p32 = por %p30, %p31
    %p33 = scmp.ne.s32.totalorder %s21, %s22
    %p34 = scmp.eq.s32.totalorder %s17, 1
    %p35 = por %p33, %p34
    %p37 = scmp.ne.s32.totalorder %s22, %s36
    %p38 = scmp.eq.s32.totalorder %s17, 0
    %p39 = por %p37, %p38
    %s41 = sadd.s32 %s40, 1
    %p44 = scmp.eq.s32.totalorder %s11, 1
    %p45 = scmp.ne.s32.totalorder %s40, %s42
    %p46 = scmp.eq.s32.totalorder %s11, 0
    %p47 = por %p45, %p46
    %p48 = scmp.ne.s32.totalorder %s40, %s42
    %p49 = scmp.eq.s32.totalorder %s16, 1
    %p50 = por %p48, %p49
    %p51 = scmp.ne.s32.totalorder %s42, %s43
    %p52 = scmp.eq.s32.totalorder %s16, 0
    %p53 = por %p51, %p52
    %p54 = scmp.ne.s32.totalorder %s42, %s43
    %p55 = scmp.eq.s32.totalorder %s17, 1
    %p56 = por %p54, %p55
    %p58 = scmp.ne.s32.totalorder %s43, %s57
    %p59 = scmp.eq.s32.totalorder %s17, 0
    %p60 = por %p58, %p59
    %s61 = ssub.s32 %s11, %s18
    %p62 = scmp.eq.s32.totalorder %s61, 0
    %s64 = sadd.s32 %s63, 1
    %s65 = scalar_select %p62, %s63, %s64
    %p68 = pneg %p62
    %p69 = scmp.eq.s32.totalorder %s11, 1
    %p70 = por %p68, %p69
    %p71 = scmp.ne.s32.totalorder %s63, %s66
    %p72 = scmp.eq.s32.totalorder %s11, 0
    %p73 = por %p71, %p72
    %p74 = scmp.ne.s32.totalorder %s63, %s66
    %p75 = scmp.eq.s32.totalorder %s16, 1
    %p76 = por %p74, %p75
    %p77 = scmp.ne.s32.totalorder %s66, %s67
    %p78 = scmp.eq.s32.totalorder %s16, 0
    %p79 = por %p77, %p78
    %p80 = scmp.ne.s32.totalorder %s66, %s67
    %p81 = scmp.eq.s32.totalorder %s17, 1
    %p82 = por %p80, %p81
    %p84 = scmp.ne.s32.totalorder %s67, %s83
    %p85 = scmp.eq.s32.totalorder %s17, 0
    %p86 = por %p84, %p85
    %s87 = ssub.s32 %s11, %s18
    %p88 = scmp.eq.s32.totalorder %s87, 0
    %s90 = sadd.s32 %s89, 1
    %s91 = scalar_select %p88, %s89, %s90
    %p94 = pneg %p88
    %p95 = scmp.eq.s32.totalorder %s11, 1
    %p96 = por %p94, %p95
    %p97 = scmp.ne.s32.totalorder %s89, %s92
    %p98 = scmp.eq.s32.totalorder %s11, 0
    %p99 = por %p97, %p98
    %p100 = scmp.ne.s32.totalorder %s89, %s92
    %p101 = scmp.eq.s32.totalorder %s16, 1
    %p102 = por %p100, %p101
    %p103 = scmp.ne.s32.totalorder %s92, %s93
    %p104 = scmp.eq.s32.totalorder %s16, 0
    %p105 = por %p103, %p104
    %p106 = scmp.ne.s32.totalorder %s92, %s93
    %p107 = scmp.eq.s32.totalorder %s17, 1
    %p108 = por %p106, %p107
    %p110 = scmp.ne.s32.totalorder %s93, %s109
    %p111 = scmp.eq.s32.totalorder %s17, 0
    %p112 = por %p110, %p111
    %s113 = ssub.s32 %s11, %s18
    %p114 = scmp.eq.s32.totalorder %s113, 0
    %s116 = sadd.s32 %s115, 1
    %s117 = scalar_select %p114, %s115, %s116
    %p120 = pneg %p114
    %p121 = scmp.eq.s32.totalorder %s11, 1
    %p122 = por %p120, %p121
    %p123 = scmp.ne.s32.totalorder %s115, %s118
    %p124 = scmp.eq.s32.totalorder %s11, 0
    %p125 = por %p123, %p124
    %p126 = scmp.ne.s32.totalorder %s115, %s118
    %p127 = scmp.eq.s32.totalorder %s16, 1
    %p128 = por %p126, %p127
    %p129 = scmp.ne.s32.totalorder %s118, %s119
    %p130 = scmp.eq.s32.totalorder %s16, 0
    %p131 = por %p129, %p130
    %p132 = scmp.ne.s32.totalorder %s118, %s119
    %p133 = scmp.eq.s32.totalorder %s17, 1
    %p134 = por %p132, %p133
    %p136 = scmp.ne.s32.totalorder %s119, %s135
    %p137 = scmp.eq.s32.totalorder %s17, 0
    %p138 = por %p136, %p137
    %s139 = ssub.s32 %s11, %s18
    %p140 = scmp.eq.s32.totalorder %s139, 0
    %s142 = sadd.s32 %s141, 1
    %s143 = scalar_select %p140, %s141, %s142
    %p146 = pneg %p140
    %p147 = scmp.eq.s32.totalorder %s11, 1
    %p148 = por %p146, %p147
    %p149 = scmp.ne.s32.totalorder %s141, %s144
    %p150 = scmp.eq.s32.totalorder %s11, 0
    %p151 = por %p149, %p150
    %p152 = scmp.ne.s32.totalorder %s141, %s144
    %p153 = scmp.eq.s32.totalorder %s16, 1
    %p154 = por %p152, %p153
    %p155 = scmp.ne.s32.totalorder %s144, %s145
    %p156 = scmp.eq.s32.totalorder %s16, 0
    %p157 = por %p155, %p156
    %p158 = scmp.ne.s32.totalorder %s144, %s145
    %p159 = scmp.eq.s32.totalorder %s17, 1
    %p160 = por %p158, %p159
    %p162 = scmp.ne.s32.totalorder %s145, %s161
    %p163 = scmp.eq.s32.totalorder %s17, 0
    %p164 = por %p162, %p163
    %p165 = scmp.le.s32.totalorder 1, %s11
    %p166 = scmp.lt.s32.totalorder %s11, 3
    %p167 = pnand %p165, %p166
    %p168 = pneg %p167
    // Predicated region
    $region9: #{question_encoder_forward.1} parent=5 // pred_check
      _
    $region10: #{question_encoder_forward.1} parent=5 // pred_check_branch
      %170 = sbr.rel (%p167) target = $region12
    $region11: #{question_encoder_forward.1} parent=5 // pred_region
      %s171 = ssub.s32 %s11, 1
      // Predicated region
      $region13: #{question_encoder_forward.1} parent=11 // pred_check
        %p172 = pneg %p32
      $region14: #{question_encoder_forward.1} parent=11 // pred_check_branch
        %174 = sbr.rel (%p172) target = $region16
      $region15: #{question_encoder_forward.1} parent=11 // pred_region
        _
      $region16: #{question_encoder_forward.1} parent=11 // pred_fallthru
        _
      // Predicated region
      $region17: #{question_encoder_forward.1} parent=11 // pred_check
        %p175 = pneg %p53
      $region18: #{question_encoder_forward.1} parent=11 // pred_check_branch
        %177 = sbr.rel (%p175) target = $region20
      $region19: #{question_encoder_forward.1} parent=11 // pred_region
        _
      $region20: #{question_encoder_forward.1} parent=11 // pred_fallthru
        _
    $region12: #{question_encoder_forward.1} parent=5 // pred_fallthru
      _
    %p178 = scmp.lt.s32.totalorder %s11, 2
    // Predicated region
    $region21: #{question_encoder_forward.1} parent=5 // pred_check
      %p179 = pneg %p178
    $region22: #{question_encoder_forward.1} parent=5 // pred_check_branch
      %181 = sbr.rel (%p179) target = $region24
    $region23: #{question_encoder_forward.1} parent=5 // pred_region
      // Predicated region
      $region25: #{question_encoder_forward.1} parent=23 // pred_check
        %p182 = pneg %p73
      $region26: #{question_encoder_forward.1} parent=23 // pred_check_branch
        %184 = sbr.rel (%p182) target = $region28
      $region27: #{question_encoder_forward.1} parent=23 // pred_region
        %p185 = scmp.lt.s32.totalorder %s11, 1
        %s186 = scalar_select %p185, %s11, 1
        %s187 = smul.addr %s186, 4
        %s188 = smul.addr %s187, 8
        %s189 = scalar_lea.vmem %s2, %s188
      $region28: #{question_encoder_forward.1} parent=23 // pred_fallthru
        _
      // Predicated region
      $region29: #{question_encoder_forward.1} parent=23 // pred_check
        %p190 = pneg %p99
      $region30: #{question_encoder_forward.1} parent=23 // pred_check_branch
        %192 = sbr.rel (%p190) target = $region32
      $region31: #{question_encoder_forward.1} parent=23 // pred_region
        %p193 = scmp.lt.s32.totalorder %s11, 1
        %s194 = scalar_select %p193, %s11, 1
        %s195 = smul.addr %s194, 4
        %s196 = smul.addr %s195, 8
        %s197 = scalar_lea.vmem %s3, %s196
      $region32: #{question_encoder_forward.1} parent=23 // pred_fallthru
        _
      // Predicated region
      $region33: #{question_encoder_forward.1} parent=23 // pred_check
        %p198 = pneg %p125
      $region34: #{question_encoder_forward.1} parent=23 // pred_check_branch
        %200 = sbr.rel (%p198) target = $region36
      $region35: #{question_encoder_forward.1} parent=23 // pred_region
        %p201 = scmp.lt.s32.totalorder %s11, 1
        %s202 = scalar_select %p201, %s11, 1
        %s203 = scalar_lea.vmem %s4, %s202
      $region36: #{question_encoder_forward.1} parent=23 // pred_fallthru
        _
    $region24: #{question_encoder_forward.1} parent=5 // pred_fallthru
      _
    %p204 = scmp.le.s32.totalorder 1, %s11
    %p205 = scmp.lt.s32.totalorder %s11, 3
    %p206 = pnand %p204, %p205
    %p207 = pneg %p206
    // Predicated region
    $region37: #{question_encoder_forward.1} parent=5 // pred_check
      _
    $region38: #{question_encoder_forward.1} parent=5 // pred_check_branch
      %209 = sbr.rel (%p206) target = $region40
    $region39: #{question_encoder_forward.1} parent=5 // pred_region
      %s210 = ssub.s32 %s11, 1
      %p211 = pneg %p32
      %p212 = pneg %p29
      %p213 = pneg %p53
      %p214 = pneg %p50
      %p215 = scmp.lt.s32.totalorder %s16, 1
      %s216 = scalar_select %p215, %s16, 1
      %s217 = smul.addr %s216, 4
      %s218 = smul.addr %s217, 8
      %s219 = scalar_lea.vmem %s2, %s218
      %p220 = pneg %p79
      %p221 = pneg %p76
      %p222 = scmp.lt.s32.totalorder %s16, 1
      %s223 = scalar_select %p222, %s16, 1
      %s224 = smul.addr %s223, 4
      %s225 = smul.addr %s224, 8
      %s226 = scalar_lea.vmem %s3, %s225
      %p227 = pneg %p105
      %p228 = pneg %p102
      %p229 = scmp.lt.s32.totalorder %s16, 1
      %s230 = scalar_select %p229, %s16, 1
      %s231 = scalar_lea.vmem %s4, %s230
      %p232 = pneg %p131
      %p233 = pneg %p128
      %p234 = pneg %p157
      %p235 = pneg %p154
      %p236 = scmp.lt.s32.totalorder %s16, 1
      %s237 = scalar_select %p236, %s16, 1
      %s238 = smul.addr %s237, 8
      %s239 = scalar_lea.vmem %s5, %s238
      %p240 = scmp.lt.s32.totalorder %s16, 1
      %s241 = scalar_select %p240, %s16, 1
      %s242 = smul.addr %s241, 4
      %s243 = smul.addr %s242, 8
      %s244 = scalar_lea.vmem %s2, %s243
      %p245 = scmp.lt.s32.totalorder %s16, 1
      %s246 = scalar_select %p245, %s16, 1
      %s247 = smul.addr %s246, 4
      %s248 = smul.addr %s247, 8
      %s249 = scalar_lea.vmem %s3, %s248
      %p250 = scmp.lt.s32.totalorder %s16, 1
      %s251 = scalar_select %p250, %s16, 1
      %s252 = scalar_lea.vmem %s4, %s251
      %p253 = scmp.lt.s32.totalorder %s16, 1
      %s254 = scalar_select %p253, %s16, 1
      %s255 = smul.addr %s254, 8
      %s256 = scalar_lea.vmem %s5, %s255
      %v257 = vld [vmem:[%s1] sm:$0xff]
      %v258 = vld [vmem:[%s1 + $0x8] sm:$0xff]
      %v259 = vld [vmem:[%s1 + $0x10] sm:$0xff]
      %v260 = vld [vmem:[%s1 + $0x18] sm:$0xff]
      %v261 = vld [vmem:[%s1 + $0x20] sm:$0xff]
      %v262 = vld [vmem:[%s1 + $0x28] sm:$0xff]
      %v263 = vld [vmem:[%s1 + $0x30] sm:$0xff]
      %v264 = vld [vmem:[%s1 + $0x38] sm:$0xff]
      %v265 = vld [vmem:[%s244] sm:$0xff]
      %v266 = vld [vmem:[%s244 + $0x8] sm:$0xff]
      %v267 = vld [vmem:[%s244 + $0x10] sm:$0xff]
      %v268 = vld [vmem:[%s244 + $0x18] sm:$0xff]
      %v269 = vld [vmem:[%s252] sm:$0x1]
      %v271 = vlaneseq
      %v272 = vshrl.u32 %v271, 7
      %v273 = vsub.s32 0, %v272
      %v274 = vrot.slane %v269, %v273
      %vm276 = vcmask 261120
      %v278 = vsel %vm276, %v257, 0
      %v281 = vsel %vm276, %v258, 0
      %v284 = vsel %vm276, %v259, 0
      %v287 = vsel %vm276, %v260, 0
      %v290 = vsel %vm276, %v261, 0
      %v293 = vsel %vm276, %v262, 0
      %v296 = vsel %vm276, %v263, 0
      %v299 = vsel %vm276, %v264, 0
      %301 = vmatprep.subr.mxu0 0.0
      %302 = vmatpush1.msra.mxu0 0.0
      %303 = vmatprep.subr.mxu0 0.0
      %304 = vmatpush1.msra.mxu0 0.0
      %305 = vmatprep.subr.mxu0 0.0
      %306 = vmatpush1.msra.mxu0 0.0
      %307 = vmatprep.subr.mxu0 0.0
      %308 = vmatpush1.msra.mxu0 0.0
      %309 = vmatprep.subr.mxu0 0.0
      %310 = vmatpush1.msra.mxu0 0.0
      %311 = vmatprep.subr.mxu0 0.0
      %312 = vmatpush1.msra.mxu0 0.0
      %313 = vmatprep.subr.mxu0 0.0
      %314 = vmatpush1.msra.mxu0 0.0
      %315 = vmatprep.subr.mxu0 0.0
      %316 = vmatpush1.msra.mxu0 0.0
      %317 = vmatprep.subr.mxu0 0.0
      %318 = vmatpush1.msra.mxu0 0.0
      %319 = vmatprep.subr.mxu0 0.0
      %320 = vmatpush1.msra.mxu0 0.0
      %321 = vmatprep.subr.mxu0 0.0
      %322 = vmatpush1.msra.mxu0 0.0
      %323 = vmatprep.subr.mxu0 0.0
      %324 = vmatpush1.msra.mxu0 0.0
      %325 = vmatprep.subr.mxu0 0.0
      %326 = vmatpush1.msra.mxu0 %v268
      %327 = vmatprep.subr.mxu0 0.0
      %328 = vmatpush1.msra.mxu0 %v267
      %329 = vmatprep.subr.mxu0 0.0
      %330 = vmatpush1.msra.mxu0 %v266
      %331 = vmatprep.subr.mxu0 0.0
      %332 = vmatpush1.msra.mxu0 %v265
      %333 = vmatprep.subr.mxu0 0.0
      %334 = vmatpush2.msra.mxu0 0.0
      %335 = vmatprep.subr.mxu0 0.0
      %336 = vmatpush2.msra.mxu0 0.0
      %337 = vmatprep.subr.mxu0 0.0
      %338 = vmatpush2.msra.mxu0 0.0
      %339 = vmatprep.subr.mxu0 0.0
      %340 = vmatpush2.msra.mxu0 0.0
      %341 = vmatprep.subr.mxu0 0.0
      %342 = vmatpush2.msra.mxu0 0.0
      %343 = vmatprep.subr.mxu0 0.0
      %344 = vmatpush2.msra.mxu0 0.0
      %345 = vmatprep.subr.mxu0 0.0
      %346 = vmatpush2.msra.mxu0 0.0
      %347 = vmatprep.subr.mxu0 0.0
      %348 = vmatpush2.msra.mxu0 0.0
      %349 = vmatprep.subr.mxu0 0.0
      %350 = vmatpush2.msra.mxu0 0.0
      %351 = vmatprep.subr.mxu0 0.0
      %352 = vmatpush2.msra.mxu0 0.0
      %353 = vmatprep.subr.mxu0 0.0
      %354 = vmatpush2.msra.mxu0 0.0
      %355 = vmatprep.subr.mxu0 0.0
      %356 = vmatpush2.msra.mxu0 0.0
      %357 = vmatprep.subr.mxu0 0.0
      %358 = vmatpush2.msra.mxu0 0.0
      %359 = vmatprep.subr.mxu0 0.0
      %360 = vmatpush2.msra.mxu0 0.0
      %361 = vmatprep.subr.mxu0 0.0
      %362 = vmatpush2.msra.mxu0 0.0
      %363 = vmatprep.subr.mxu0 0.0
      %364 = vmatpush2.msra.mxu0 0.0
      %365 = vmatprep.mubr.f32.mxu0 0.0
      %366 = vmatmul.mubr.f32.gmra.mxu0 %v278
      %v367 = vpop.f32.mrf.mxu0
      %v368 = vadd.f32 %v274, %v367
      %v369 = vpop.f32.mrf.mxu0
      %370 = vmatprep.mubr.f32.mxu0 0.0
      %371 = vmatmul.mubr.f32.gmra.mxu0 %v281
      %v372 = vpop.f32.mrf.mxu0
      %v373 = vadd.f32 %v274, %v372
      %v374 = vpop.f32.mrf.mxu0
      %375 = vmatprep.mubr.f32.mxu0 0.0
      %376 = vmatmul.mubr.f32.gmra.mxu0 %v284
      %v377 = vpop.f32.mrf.mxu0
      %v378 = vadd.f32 %v274, %v377
      %v379 = vpop.f32.mrf.mxu0
      %380 = vmatprep.mubr.f32.mxu0 0.0
      %381 = vmatmul.mubr.f32.gmra.mxu0 %v287
      %v382 = vpop.f32.mrf.mxu0
      %v383 = vadd.f32 %v274, %v382
      %v384 = vpop.f32.mrf.mxu0
      %385 = vmatprep.mubr.f32.mxu0 0.0
      %386 = vmatmul.mubr.f32.gmra.mxu0 %v290
      %v387 = vpop.f32.mrf.mxu0
      %v388 = vadd.f32 %v274, %v387
      %v389 = vpop.f32.mrf.mxu0
      %390 = vmatprep.mubr.f32.mxu0 0.0
      %391 = vmatmul.mubr.f32.gmra.mxu0 %v293
      %v392 = vpop.f32.mrf.mxu0
      %v393 = vadd.f32 %v274, %v392
      %v394 = vpop.f32.mrf.mxu0
      %395 = vmatprep.mubr.f32.mxu0 0.0
      %396 = vmatmul.mubr.f32.gmra.mxu0 %v296
      %v397 = vpop.f32.mrf.mxu0
      %v398 = vadd.f32 %v274, %v397
      %v399 = vpop.f32.mrf.mxu0
      %400 = vmatprep.mubr.f32.mxu0 0.0
      %401 = vmatmul.mubr.f32.gmra.mxu0 %v299
      %v402 = vpop.f32.mrf.mxu0
      %v403 = vadd.f32 %v274, %v402
      %v404 = vpop.f32.mrf.mxu0
      %405 = vdwg.mxu0
      %406 = vst [vmem:[#allocation2] sm:$0xff] %v368
      %s407 = scalar_lea.vmem [#allocation2], 8
      %408 = vst [vmem:[%s407] sm:$0xff] %v373
      %s409 = scalar_lea.vmem [#allocation2], 16
      %410 = vst [vmem:[%s409] sm:$0xff] %v378
      %s411 = scalar_lea.vmem [#allocation2], 24
      %412 = vst [vmem:[%s411] sm:$0xff] %v383
      %s413 = scalar_lea.vmem [#allocation2], 32
      %414 = vst [vmem:[%s413] sm:$0xff] %v388
      %s415 = scalar_lea.vmem [#allocation2], 40
      %416 = vst [vmem:[%s415] sm:$0xff] %v393
      %s417 = scalar_lea.vmem [#allocation2], 48
      %418 = vst [vmem:[%s417] sm:$0xff] %v398
      %s419 = scalar_lea.vmem [#allocation2], 56
      %420 = vst [vmem:[%s419] sm:$0xff] %v403
      %v421 = vld [vmem:[%s0] sm:$0xff]
      %v422 = vld [vmem:[%s249] sm:$0xff]
      %v423 = vld [vmem:[%s249 + $0x8] sm:$0xff]
      %v424 = vld [vmem:[%s249 + $0x10] sm:$0xff]
      %v425 = vld [vmem:[%s249 + $0x18] sm:$0xff]
      %p426 = scmp.eq.s32.totalorder %s16, 0
      %s427 = scalar_select %p426, 0, 7
      %s428 = smul.u32 %s427, 8
      %s429 = scalar_lea.vmem [#allocation2], %s428
      %v430 = vld [vmem:[%s429] sm:$0xff]
      %v432 = vsel %vm276, 0.0, 0
      %434 = vmatprep.subr.mxu0 0.0
      %435 = vmatpush1.msra.mxu0 0.0
      %436 = vmatprep.subr.mxu0 0.0
      %437 = vmatpush1.msra.mxu0 0.0
      %438 = vmatprep.subr.mxu0 0.0
      %439 = vmatpush1.msra.mxu0 0.0
      %440 = vmatprep.subr.mxu0 0.0
      %441 = vmatpush1.msra.mxu0 0.0
      %442 = vmatprep.subr.mxu0 0.0
      %443 = vmatpush1.msra.mxu0 0.0
      %444 = vmatprep.subr.mxu0 0.0
      %445 = vmatpush1.msra.mxu0 0.0
      %446 = vmatprep.subr.mxu0 0.0
      %447 = vmatpush1.msra.mxu0 0.0
      %448 = vmatprep.subr.mxu0 0.0
      %449 = vmatpush1.msra.mxu0 0.0
      %450 = vmatprep.subr.mxu0 0.0
      %451 = vmatpush1.msra.mxu0 0.0
      %452 = vmatprep.subr.mxu0 0.0
      %453 = vmatpush1.msra.mxu0 0.0
      %454 = vmatprep.subr.mxu0 0.0
      %455 = vmatpush1.msra.mxu0 0.0
      %456 = vmatprep.subr.mxu0 0.0
      %457 = vmatpush1.msra.mxu0 0.0
      %458 = vmatprep.subr.mxu0 0.0
      %459 = vmatpush1.msra.mxu0 %v425
      %460 = vmatprep.subr.mxu0 0.0
      %461 = vmatpush1.msra.mxu0 %v424
      %462 = vmatprep.subr.mxu0 0.0
      %463 = vmatpush1.msra.mxu0 %v423
      %464 = vmatprep.subr.mxu0 0.0
      %465 = vmatpush1.msra.mxu0 %v422
      %466 = vmatprep.subr.mxu0 0.0
      %467 = vmatpush2.msra.mxu0 0.0
      %468 = vmatprep.subr.mxu0 0.0
      %469 = vmatpush2.msra.mxu0 0.0
      %470 = vmatprep.subr.mxu0 0.0
      %471 = vmatpush2.msra.mxu0 0.0
      %472 = vmatprep.subr.mxu0 0.0
      %473 = vmatpush2.msra.mxu0 0.0
      %474 = vmatprep.subr.mxu0 0.0
      %475 = vmatpush2.msra.mxu0 0.0
      %476 = vmatprep.subr.mxu0 0.0
      %477 = vmatpush2.msra.mxu0 0.0
      %478 = vmatprep.subr.mxu0 0.0
      %479 = vmatpush2.msra.mxu0 0.0
      %480 = vmatprep.subr.mxu0 0.0
      %481 = vmatpush2.msra.mxu0 0.0
      %482 = vmatprep.subr.mxu0 0.0
      %483 = vmatpush2.msra.mxu0 0.0
      %484 = vmatprep.subr.mxu0 0.0
      %485 = vmatpush2.msra.mxu0 0.0
      %486 = vmatprep.subr.mxu0 0.0
      %487 = vmatpush2.msra.mxu0 0.0
      %488 = vmatprep.subr.mxu0 0.0
      %489 = vmatpush2.msra.mxu0 0.0
      %490 = vmatprep.subr.mxu0 0.0
      %491 = vmatpush2.msra.mxu0 0.0
      %492 = vmatprep.subr.mxu0 0.0
      %493 = vmatpush2.msra.mxu0 0.0
      %494 = vmatprep.subr.mxu0 0.0
      %495 = vmatpush2.msra.mxu0 0.0
      %496 = vmatprep.subr.mxu0 0.0
      %497 = vmatpush2.msra.mxu0 0.0
      %498 = vmatprep.mubr.f32.mxu0 0.0
      %499 = vmatmul.mubr.f32.gmra.mxu0 %v432
      %v500 = vpop.f32.mrf.mxu0
      %v501 = vadd.f32 0.0, %v500
      %v502 = vpop.f32.mrf.mxu0
      %503 = vdwg.mxu0
      %v504 = vadd.f32 %v430, %v501
      %v505 = vxor.u32 %v504, 2147483648
      %v506 = vmul.f32 %v505, 1.442695
      %v507 = vpow.pop %v506
      %v508 = vadd.f32 %v507, 1.0
      %v509 = vrcp.pop %v508
      %v510 = vmul.f32 1.0, %v509
      %v511 = vtanh.pop %v504
      %v512 = vmul.f32 %v510, 0.0
      %514 = vrot.lane.b32.xlu0 %v511, 64
      %v515 = vpop.permute.xlu0 %514
      %v517 = vmul.f32 %v510, %v515
      %519 = vrot.lane.b32.xlu0 %v517, 32
      %v520 = vpop.permute.xlu0 %519
      %v522 = vadd.f32 %v512, %v520
      %v523 = vtanh.pop %v522
      %525 = vrot.lane.b32.xlu0 %v523, 64
      %v526 = vpop.permute.xlu0 %525
      %v528 = vmul.f32 %v510, %v526
      %v529 = vstv %s427
      %vm530 = vcmp.lt.s32.totalorder %v529, %v421
      %v531 = vsel %vm530, 1, 0
      %532 = vset.pattern.permute.xlu0 0
      %533 = vperm.xlu0 %532, %v531
      %v534 = vpop.permute.xlu0 %533
      %vm535 = vcmp.eq.s32.totalorder %v534, 1
      %v536 = vsel %vm535, %v528, 0.0
      %v537 = vsel %vm535, %v522, 0.0
      %s538 = scalar_select %p426, 1, 6
      %s539 = smul.u32 %s538, 8
      %s540 = scalar_lea.vmem [#allocation2], %s539
      %v541 = vld [vmem:[%s540] sm:$0xff]
      %543 = vrot.lane.b32.xlu0 %v536, 32
      %v544 = vpop.permute.xlu0 %543
      %v545 = vsel %vm276, %v544, 0
      %547 = vmatprep.subr.mxu0 0.0
      %548 = vmatpush1.msra.mxu0 0.0
      %549 = vmatprep.subr.mxu0 0.0
      %550 = vmatpush1.msra.mxu0 0.0
      %551 = vmatprep.subr.mxu0 0.0
      %552 = vmatpush1.msra.mxu0 0.0
      %553 = vmatprep.subr.mxu0 0.0
      %554 = vmatpush1.msra.mxu0 0.0
      %555 = vmatprep.subr.mxu0 0.0
      %556 = vmatpush1.msra.mxu0 0.0
      %557 = vmatprep.subr.mxu0 0.0
      %558 = vmatpush1.msra.mxu0 0.0
      %559 = vmatprep.subr.mxu0 0.0
      %560 = vmatpush1.msra.mxu0 0.0
      %561 = vmatprep.subr.mxu0 0.0
      %562 = vmatpush1.msra.mxu0 0.0
      %563 = vmatprep.subr.mxu0 0.0
      %564 = vmatpush1.msra.mxu0 0.0
      %565 = vmatprep.subr.mxu0 0.0
      %566 = vmatpush1.msra.mxu0 0.0
      %567 = vmatprep.subr.mxu0 0.0
      %568 = vmatpush1.msra.mxu0 0.0
      %569 = vmatprep.subr.mxu0 0.0
      %570 = vmatpush1.msra.mxu0 0.0
      %571 = vmatprep.subr.mxu0 0.0
      %572 = vmatpush1.msra.mxu0 %v425
      %573 = vmatprep.subr.mxu0 0.0
      %574 = vmatpush1.msra.mxu0 %v424
      %575 = vmatprep.subr.mxu0 0.0
      %576 = vmatpush1.msra.mxu0 %v423
      %577 = vmatprep.subr.mxu0 0.0
      %578 = vmatpush1.msra.mxu0 %v422
      %579 = vmatprep.subr.mxu0 0.0
      %580 = vmatpush2.msra.mxu0 0.0
      %581 = vmatprep.subr.mxu0 0.0
      %582 = vmatpush2.msra.mxu0 0.0
      %583 = vmatprep.subr.mxu0 0.0
      %584 = vmatpush2.msra.mxu0 0.0
      %585 = vmatprep.subr.mxu0 0.0
      %586 = vmatpush2.msra.mxu0 0.0
      %587 = vmatprep.subr.mxu0 0.0
      %588 = vmatpush2.msra.mxu0 0.0
      %589 = vmatprep.subr.mxu0 0.0
      %590 = vmatpush2.msra.mxu0 0.0
      %591 = vmatprep.subr.mxu0 0.0
      %592 = vmatpush2.msra.mxu0 0.0
      %593 = vmatprep.subr.mxu0 0.0
      %594 = vmatpush2.msra.mxu0 0.0
      %595 = vmatprep.subr.mxu0 0.0
      %596 = vmatpush2.msra.mxu0 0.0
      %597 = vmatprep.subr.mxu0 0.0
      %598 = vmatpush2.msra.mxu0 0.0
      %599 = vmatprep.subr.mxu0 0.0
      %600 = vmatpush2.msra.mxu0 0.0
      %601 = vmatprep.subr.mxu0 0.0
      %602 = vmatpush2.msra.mxu0 0.0
      %603 = vmatprep.subr.mxu0 0.0
      %604 = vmatpush2.msra.mxu0 0.0
      %605 = vmatprep.subr.mxu0 0.0
      %606 = vmatpush2.msra.mxu0 0.0
      %607 = vmatprep.subr.mxu0 0.0
      %608 = vmatpush2.msra.mxu0 0.0
      %609 = vmatprep.subr.mxu0 0.0
      %610 = vmatpush2.msra.mxu0 0.0
      %611 = vmatprep.mubr.f32.mxu0 0.0
      %612 = vmatmul.mubr.f32.gmra.mxu0 %v545
      %v613 = vpop.f32.mrf.mxu0
      %v614 = vadd.f32 0.0, %v613
      %v615 = vpop.f32.mrf.mxu0
      %616 = vdwg.mxu0
      %v617 = vadd.f32 %v541, %v614
      %v618 = vxor.u32 %v617, 2147483648
      %v619 = vmul.f32 %v618, 1.442695
      %v620 = vpow.pop %v619
      %v621 = vadd.f32 %v620, 1.0
      %v622 = vrcp.pop %v621
      %v623 = vmul.f32 1.0, %v622
      %v624 = vtanh.pop %v617
      %v625 = vmul.f32 %v623, %v537
      %627 = vrot.lane.b32.xlu0 %v624, 64
      %v628 = vpop.permute.xlu0 %627
      %v630 = vmul.f32 %v623, %v628
      %632 = vrot.lane.b32.xlu0 %v630, 32
      %v633 = vpop.permute.xlu0 %632
      %v635 = vadd.f32 %v625, %v633
      %v636 = vtanh.pop %v635
      %638 = vrot.lane.b32.xlu0 %v636, 64
      %v639 = vpop.permute.xlu0 %638
      %v641 = vmul.f32 %v623, %v639
      %v642 = vstv %s538
      %vm643 = vcmp.lt.s32.totalorder %v642, %v421
      %v644 = vsel %vm643, 1, 0
      %645 = vset.pattern.permute.xlu0 0
      %646 = vperm.xlu0 %645, %v644
      %v647 = vpop.permute.xlu0 %646
      %vm648 = vcmp.eq.s32.totalorder %v647, 1
      %v649 = vsel %vm648, %v641, %v536
      %v650 = vsel %vm648, %v635, %v537
      %s651 = scalar_select %p426, 2, 5
      %s652 = smul.u32 %s651, 8
      %s653 = scalar_lea.vmem [#allocation2], %s652
      %v654 = vld [vmem:[%s653] sm:$0xff]
      %656 = vrot.lane.b32.xlu0 %v649, 32
      %v657 = vpop.permute.xlu0 %656
      %v658 = vsel %vm276, %v657, 0
      %660 = vmatprep.subr.mxu0 0.0
      %661 = vmatpush1.msra.mxu0 0.0
      %662 = vmatprep.subr.mxu0 0.0
      %663 = vmatpush1.msra.mxu0 0.0
      %664 = vmatprep.subr.mxu0 0.0
      %665 = vmatpush1.msra.mxu0 0.0
      %666 = vmatprep.subr.mxu0 0.0
      %667 = vmatpush1.msra.mxu0 0.0
      %668 = vmatprep.subr.mxu0 0.0
      %669 = vmatpush1.msra.mxu0 0.0
      %670 = vmatprep.subr.mxu0 0.0
      %671 = vmatpush1.msra.mxu0 0.0
      %672 = vmatprep.subr.mxu0 0.0
      %673 = vmatpush1.msra.mxu0 0.0
      %674 = vmatprep.subr.mxu0 0.0
      %675 = vmatpush1.msra.mxu0 0.0
      %676 = vmatprep.subr.mxu0 0.0
      %677 = vmatpush1.msra.mxu0 0.0
      %678 = vmatprep.subr.mxu0 0.0
      %679 = vmatpush1.msra.mxu0 0.0
      %680 = vmatprep.subr.mxu0 0.0
      %681 = vmatpush1.msra.mxu0 0.0
      %682 = vmatprep.subr.mxu0 0.0
      %683 = vmatpush1.msra.mxu0 0.0
      %684 = vmatprep.subr.mxu0 0.0
      %685 = vmatpush1.msra.mxu0 %v425
      %686 = vmatprep.subr.mxu0 0.0
      %687 = vmatpush1.msra.mxu0 %v424
      %688 = vmatprep.subr.mxu0 0.0
      %689 = vmatpush1.msra.mxu0 %v423
      %690 = vmatprep.subr.mxu0 0.0
      %691 = vmatpush1.msra.mxu0 %v422
      %692 = vmatprep.subr.mxu0 0.0
      %693 = vmatpush2.msra.mxu0 0.0
      %694 = vmatprep.subr.mxu0 0.0
      %695 = vmatpush2.msra.mxu0 0.0
      %696 = vmatprep.subr.mxu0 0.0
      %697 = vmatpush2.msra.mxu0 0.0
      %698 = vmatprep.subr.mxu0 0.0
      %699 = vmatpush2.msra.mxu0 0.0
      %700 = vmatprep.subr.mxu0 0.0
      %701 = vmatpush2.msra.mxu0 0.0
      %702 = vmatprep.subr.mxu0 0.0
      %703 = vmatpush2.msra.mxu0 0.0
      %704 = vmatprep.subr.mxu0 0.0
      %705 = vmatpush2.msra.mxu0 0.0
      %706 = vmatprep.subr.mxu0 0.0
      %707 = vmatpush2.msra.mxu0 0.0
      %708 = vmatprep.subr.mxu0 0.0
      %709 = vmatpush2.msra.mxu0 0.0
      %710 = vmatprep.subr.mxu0 0.0
      %711 = vmatpush2.msra.mxu0 0.0
      %712 = vmatprep.subr.mxu0 0.0
      %713 = vmatpush2.msra.mxu0 0.0
      %714 = vmatprep.subr.mxu0 0.0
      %715 = vmatpush2.msra.mxu0 0.0
      %716 = vmatprep.subr.mxu0 0.0
      %717 = vmatpush2.msra.mxu0 0.0
      %718 = vmatprep.subr.mxu0 0.0
      %719 = vmatpush2.msra.mxu0 0.0
      %720 = vmatprep.subr.mxu0 0.0
      %721 = vmatpush2.msra.mxu0 0.0
      %722 = vmatprep.subr.mxu0 0.0
      %723 = vmatpush2.msra.mxu0 0.0
      %724 = vmatprep.mubr.f32.mxu0 0.0
      %725 = vmatmul.mubr.f32.gmra.mxu0 %v658
      %v726 = vpop.f32.mrf.mxu0
      %v727 = vadd.f32 0.0, %v726
      %v728 = vpop.f32.mrf.mxu0
      %729 = vdwg.mxu0
      %v730 = vadd.f32 %v654, %v727
      %v731 = vxor.u32 %v730, 2147483648
      %v732 = vmul.f32 %v731, 1.442695
      %v733 = vpow.pop %v732
      %v734 = vadd.f32 %v733, 1.0
      %v735 = vrcp.pop %v734
      %v736 = vmul.f32 1.0, %v735
      %v737 = vtanh.pop %v730
      %v738 = vmul.f32 %v736, %v650
      %740 = vrot.lane.b32.xlu0 %v737, 64
      %v741 = vpop.permute.xlu0 %740
      %v743 = vmul.f32 %v736, %v741
      %745 = vrot.lane.b32.xlu0 %v743, 32
      %v746 = vpop.permute.xlu0 %745
      %v748 = vadd.f32 %v738, %v746
      %v749 = vtanh.pop %v748
      %751 = vrot.lane.b32.xlu0 %v749, 64
      %v752 = vpop.permute.xlu0 %751
      %v754 = vmul.f32 %v736, %v752
      %v755 = vstv %s651
      %vm756 = vcmp.lt.s32.totalorder %v755, %v421
      %v757 = vsel %vm756, 1, 0
      %758 = vset.pattern.permute.xlu0 0
      %759 = vperm.xlu0 %758, %v757
      %v760 = vpop.permute.xlu0 %759
      %vm761 = vcmp.eq.s32.totalorder %v760, 1
      %v762 = vsel %vm761, %v754, %v649
      %v763 = vsel %vm761, %v748, %v650
      %s764 = scalar_select %p426, 3, 4
      %s765 = smul.u32 %s764, 8
      %s766 = scalar_lea.vmem [#allocation2], %s765
      %v767 = vld [vmem:[%s766] sm:$0xff]
      %769 = vrot.lane.b32.xlu0 %v762, 32
      %v770 = vpop.permute.xlu0 %769
      %v771 = vsel %vm276, %v770, 0
      %773 = vmatprep.subr.mxu0 0.0
      %774 = vmatpush1.msra.mxu0 0.0
      %775 = vmatprep.subr.mxu0 0.0
      %776 = vmatpush1.msra.mxu0 0.0
      %777 = vmatprep.subr.mxu0 0.0
      %778 = vmatpush1.msra.mxu0 0.0
      %779 = vmatprep.subr.mxu0 0.0
      %780 = vmatpush1.msra.mxu0 0.0
      %781 = vmatprep.subr.mxu0 0.0
      %782 = vmatpush1.msra.mxu0 0.0
      %783 = vmatprep.subr.mxu0 0.0
      %784 = vmatpush1.msra.mxu0 0.0
      %785 = vmatprep.subr.mxu0 0.0
      %786 = vmatpush1.msra.mxu0 0.0
      %787 = vmatprep.subr.mxu0 0.0
      %788 = vmatpush1.msra.mxu0 0.0
      %789 = vmatprep.subr.mxu0 0.0
      %790 = vmatpush1.msra.mxu0 0.0
      %791 = vmatprep.subr.mxu0 0.0
      %792 = vmatpush1.msra.mxu0 0.0
      %793 = vmatprep.subr.mxu0 0.0
      %794 = vmatpush1.msra.mxu0 0.0
      %795 = vmatprep.subr.mxu0 0.0
      %796 = vmatpush1.msra.mxu0 0.0
      %797 = vmatprep.subr.mxu0 0.0
      %798 = vmatpush1.msra.mxu0 %v425
      %799 = vmatprep.subr.mxu0 0.0
      %800 = vmatpush1.msra.mxu0 %v424
      %801 = vmatprep.subr.mxu0 0.0
      %802 = vmatpush1.msra.mxu0 %v423
      %803 = vmatprep.subr.mxu0 0.0
      %804 = vmatpush1.msra.mxu0 %v422
      %805 = vmatprep.subr.mxu0 0.0
      %806 = vmatpush2.msra.mxu0 0.0
      %807 = vmatprep.subr.mxu0 0.0
      %808 = vmatpush2.msra.mxu0 0.0
      %809 = vmatprep.subr.mxu0 0.0
      %810 = vmatpush2.msra.mxu0 0.0
      %811 = vmatprep.subr.mxu0 0.0
      %812 = vmatpush2.msra.mxu0 0.0
      %813 = vmatprep.subr.mxu0 0.0
      %814 = vmatpush2.msra.mxu0 0.0
      %815 = vmatprep.subr.mxu0 0.0
      %816 = vmatpush2.msra.mxu0 0.0
      %817 = vmatprep.subr.mxu0 0.0
      %818 = vmatpush2.msra.mxu0 0.0
      %819 = vmatprep.subr.mxu0 0.0
      %820 = vmatpush2.msra.mxu0 0.0
      %821 = vmatprep.subr.mxu0 0.0
      %822 = vmatpush2.msra.mxu0 0.0
      %823 = vmatprep.subr.mxu0 0.0
      %824 = vmatpush2.msra.mxu0 0.0
      %825 = vmatprep.subr.mxu0 0.0
      %826 = vmatpush2.msra.mxu0 0.0
      %827 = vmatprep.subr.mxu0 0.0
      %828 = vmatpush2.msra.mxu0 0.0
      %829 = vmatprep.subr.mxu0 0.0
      %830 = vmatpush2.msra.mxu0 0.0
      %831 = vmatprep.subr.mxu0 0.0
      %832 = vmatpush2.msra.mxu0 0.0
      %833 = vmatprep.subr.mxu0 0.0
      %834 = vmatpush2.msra.mxu0 0.0
      %835 = vmatprep.subr.mxu0 0.0
      %836 = vmatpush2.msra.mxu0 0.0
      %837 = vmatprep.mubr.f32.mxu0 0.0
      %838 = vmatmul.mubr.f32.gmra.mxu0 %v771
      %v839 = vpop.f32.mrf.mxu0
      %v840 = vadd.f32 0.0, %v839
      %v841 = vpop.f32.mrf.mxu0
      %842 = vdwg.mxu0
      %v843 = vadd.f32 %v767, %v840
      %v844 = vxor.u32 %v843, 2147483648
      %v845 = vmul.f32 %v844, 1.442695
      %v846 = vpow.pop %v845
      %v847 = vadd.f32 %v846, 1.0
      %v848 = vrcp.pop %v847
      %v849 = vmul.f32 1.0, %v848
      %v850 = vtanh.pop %v843
      %v851 = vmul.f32 %v849, %v763
      %853 = vrot.lane.b32.xlu0 %v850, 64
      %v854 = vpop.permute.xlu0 %853
      %v856 = vmul.f32 %v849, %v854
      %858 = vrot.lane.b32.xlu0 %v856, 32
      %v859 = vpop.permute.xlu0 %858
      %v861 = vadd.f32 %v851, %v859
      %v862 = vtanh.pop %v861
      %864 = vrot.lane.b32.xlu0 %v862, 64
      %v865 = vpop.permute.xlu0 %864
      %v867 = vmul.f32 %v849, %v865
      %v868 = vstv %s764
      %vm869 = vcmp.lt.s32.totalorder %v868, %v421
      %v870 = vsel %vm869, 1, 0
      %871 = vset.pattern.permute.xlu0 0
      %872 = vperm.xlu0 %871, %v870
      %v873 = vpop.permute.xlu0 %872
      %vm874 = vcmp.eq.s32.totalorder %v873, 1
      %v875 = vsel %vm874, %v867, %v762
      %v876 = vsel %vm874, %v861, %v763
      %s877 = scalar_select %p426, 4, 3
      %s878 = smul.u32 %s877, 8
      %s879 = scalar_lea.vmem [#allocation2], %s878
      %v880 = vld [vmem:[%s879] sm:$0xff]
      %882 = vrot.lane.b32.xlu0 %v875, 32
      %v883 = vpop.permute.xlu0 %882
      %v884 = vsel %vm276, %v883, 0
      %886 = vmatprep.subr.mxu0 0.0
      %887 = vmatpush1.msra.mxu0 0.0
      %888 = vmatprep.subr.mxu0 0.0
      %889 = vmatpush1.msra.mxu0 0.0
      %890 = vmatprep.subr.mxu0 0.0
      %891 = vmatpush1.msra.mxu0 0.0
      %892 = vmatprep.subr.mxu0 0.0
      %893 = vmatpush1.msra.mxu0 0.0
      %894 = vmatprep.subr.mxu0 0.0
      %895 = vmatpush1.msra.mxu0 0.0
      %896 = vmatprep.subr.mxu0 0.0
      %897 = vmatpush1.msra.mxu0 0.0
      %898 = vmatprep.subr.mxu0 0.0
      %899 = vmatpush1.msra.mxu0 0.0
      %900 = vmatprep.subr.mxu0 0.0
      %901 = vmatpush1.msra.mxu0 0.0
      %902 = vmatprep.subr.mxu0 0.0
      %903 = vmatpush1.msra.mxu0 0.0
      %904 = vmatprep.subr.mxu0 0.0
      %905 = vmatpush1.msra.mxu0 0.0
      %906 = vmatprep.subr.mxu0 0.0
      %907 = vmatpush1.msra.mxu0 0.0
      %908 = vmatprep.subr.mxu0 0.0
      %909 = vmatpush1.msra.mxu0 0.0
      %910 = vmatprep.subr.mxu0 0.0
      %911 = vmatpush1.msra.mxu0 %v425
      %912 = vmatprep.subr.mxu0 0.0
      %913 = vmatpush1.msra.mxu0 %v424
      %914 = vmatprep.subr.mxu0 0.0
      %915 = vmatpush1.msra.mxu0 %v423
      %916 = vmatprep.subr.mxu0 0.0
      %917 = vmatpush1.msra.mxu0 %v422
      %918 = vmatprep.subr.mxu0 0.0
      %919 = vmatpush2.msra.mxu0 0.0
      %920 = vmatprep.subr.mxu0 0.0
      %921 = vmatpush2.msra.mxu0 0.0
      %922 = vmatprep.subr.mxu0 0.0
      %923 = vmatpush2.msra.mxu0 0.0
      %924 = vmatprep.subr.mxu0 0.0
      %925 = vmatpush2.msra.mxu0 0.0
      %926 = vmatprep.subr.mxu0 0.0
      %927 = vmatpush2.msra.mxu0 0.0
      %928 = vmatprep.subr.mxu0 0.0
      %929 = vmatpush2.msra.mxu0 0.0
      %930 = vmatprep.subr.mxu0 0.0
      %931 = vmatpush2.msra.mxu0 0.0
      %932 = vmatprep.subr.mxu0 0.0
      %933 = vmatpush2.msra.mxu0 0.0
      %934 = vmatprep.subr.mxu0 0.0
      %935 = vmatpush2.msra.mxu0 0.0
      %936 = vmatprep.subr.mxu0 0.0
      %937 = vmatpush2.msra.mxu0 0.0
      %938 = vmatprep.subr.mxu0 0.0
      %939 = vmatpush2.msra.mxu0 0.0
      %940 = vmatprep.subr.mxu0 0.0
      %941 = vmatpush2.msra.mxu0 0.0
      %942 = vmatprep.subr.mxu0 0.0
      %943 = vmatpush2.msra.mxu0 0.0
      %944 = vmatprep.subr.mxu0 0.0
      %945 = vmatpush2.msra.mxu0 0.0
      %946 = vmatprep.subr.mxu0 0.0
      %947 = vmatpush2.msra.mxu0 0.0
      %948 = vmatprep.subr.mxu0 0.0
      %949 = vmatpush2.msra.mxu0 0.0
      %950 = vmatprep.mubr.f32.mxu0 0.0
      %951 = vmatmul.mubr.f32.gmra.mxu0 %v884
      %v952 = vpop.f32.mrf.mxu0
      %v953 = vadd.f32 0.0, %v952
      %v954 = vpop.f32.mrf.mxu0
      %955 = vdwg.mxu0
      %v956 = vadd.f32 %v880, %v953
      %v957 = vxor.u32 %v956, 2147483648
      %v958 = vmul.f32 %v957, 1.442695
      %v959 = vpow.pop %v958
      %v960 = vadd.f32 %v959, 1.0
      %v961 = vrcp.pop %v960
      %v962 = vmul.f32 1.0, %v961
      %v963 = vtanh.pop %v956
      %v964 = vmul.f32 %v962, %v876
      %966 = vrot.lane.b32.xlu0 %v963, 64
      %v967 = vpop.permute.xlu0 %966
      %v969 = vmul.f32 %v962, %v967
      %971 = vrot.lane.b32.xlu0 %v969, 32
      %v972 = vpop.permute.xlu0 %971
      %v974 = vadd.f32 %v964, %v972
      %v975 = vtanh.pop %v974
      %977 = vrot.lane.b32.xlu0 %v975, 64
      %v978 = vpop.permute.xlu0 %977
      %v980 = vmul.f32 %v962, %v978
      %v981 = vstv %s877
      %vm982 = vcmp.lt.s32.totalorder %v981, %v421
      %v983 = vsel %vm982, 1, 0
      %984 = vset.pattern.permute.xlu0 0
      %985 = vperm.xlu0 %984, %v983
      %v986 = vpop.permute.xlu0 %985
      %vm987 = vcmp.eq.s32.totalorder %v986, 1
      %v988 = vsel %vm987, %v980, %v875
      %v989 = vsel %vm987, %v974, %v876
      %s990 = scalar_select %p426, 5, 2
      %s991 = smul.u32 %s990, 8
      %s992 = scalar_lea.vmem [#allocation2], %s991
      %v993 = vld [vmem:[%s992] sm:$0xff]
      %995 = vrot.lane.b32.xlu0 %v988, 32
      %v996 = vpop.permute.xlu0 %995
      %v997 = vsel %vm276, %v996, 0
      %999 = vmatprep.subr.mxu0 0.0
      %1000 = vmatpush1.msra.mxu0 0.0
      %1001 = vmatprep.subr.mxu0 0.0
      %1002 = vmatpush1.msra.mxu0 0.0
      %1003 = vmatprep.subr.mxu0 0.0
      %1004 = vmatpush1.msra.mxu0 0.0
      %1005 = vmatprep.subr.mxu0 0.0
      %1006 = vmatpush1.msra.mxu0 0.0
      %1007 = vmatprep.subr.mxu0 0.0
      %1008 = vmatpush1.msra.mxu0 0.0
      %1009 = vmatprep.subr.mxu0 0.0
      %1010 = vmatpush1.msra.mxu0 0.0
      %1011 = vmatprep.subr.mxu0 0.0
      %1012 = vmatpush1.msra.mxu0 0.0
      %1013 = vmatprep.subr.mxu0 0.0
      %1014 = vmatpush1.msra.mxu0 0.0
      %1015 = vmatprep.subr.mxu0 0.0
      %1016 = vmatpush1.msra.mxu0 0.0
      %1017 = vmatprep.subr.mxu0 0.0
      %1018 = vmatpush1.msra.mxu0 0.0
      %1019 = vmatprep.subr.mxu0 0.0
      %1020 = vmatpush1.msra.mxu0 0.0
      %1021 = vmatprep.subr.mxu0 0.0
      %1022 = vmatpush1.msra.mxu0 0.0
      %1023 = vmatprep.subr.mxu0 0.0
      %1024 = vmatpush1.msra.mxu0 %v425
      %1025 = vmatprep.subr.mxu0 0.0
      %1026 = vmatpush1.msra.mxu0 %v424
      %1027 = vmatprep.subr.mxu0 0.0
      %1028 = vmatpush1.msra.mxu0 %v423
      %1029 = vmatprep.subr.mxu0 0.0
      %1030 = vmatpush1.msra.mxu0 %v422
      %1031 = vmatprep.subr.mxu0 0.0
      %1032 = vmatpush2.msra.mxu0 0.0
      %1033 = vmatprep.subr.mxu0 0.0
      %1034 = vmatpush2.msra.mxu0 0.0
      %1035 = vmatprep.subr.mxu0 0.0
      %1036 = vmatpush2.msra.mxu0 0.0
      %1037 = vmatprep.subr.mxu0 0.0
      %1038 = vmatpush2.msra.mxu0 0.0
      %1039 = vmatprep.subr.mxu0 0.0
      %1040 = vmatpush2.msra.mxu0 0.0
      %1041 = vmatprep.subr.mxu0 0.0
      %1042 = vmatpush2.msra.mxu0 0.0
      %1043 = vmatprep.subr.mxu0 0.0
      %1044 = vmatpush2.msra.mxu0 0.0
      %1045 = vmatprep.subr.mxu0 0.0
      %1046 = vmatpush2.msra.mxu0 0.0
      %1047 = vmatprep.subr.mxu0 0.0
      %1048 = vmatpush2.msra.mxu0 0.0
      %1049 = vmatprep.subr.mxu0 0.0
      %1050 = vmatpush2.msra.mxu0 0.0
      %1051 = vmatprep.subr.mxu0 0.0
      %1052 = vmatpush2.msra.mxu0 0.0
      %1053 = vmatprep.subr.mxu0 0.0
      %1054 = vmatpush2.msra.mxu0 0.0
      %1055 = vmatprep.subr.mxu0 0.0
      %1056 = vmatpush2.msra.mxu0 0.0
      %1057 = vmatprep.subr.mxu0 0.0
      %1058 = vmatpush2.msra.mxu0 0.0
      %1059 = vmatprep.subr.mxu0 0.0
      %1060 = vmatpush2.msra.mxu0 0.0
      %1061 = vmatprep.subr.mxu0 0.0
      %1062 = vmatpush2.msra.mxu0 0.0
      %1063 = vmatprep.mubr.f32.mxu0 0.0
      %1064 = vmatmul.mubr.f32.gmra.mxu0 %v997
      %v1065 = vpop.f32.mrf.mxu0
      %v1066 = vadd.f32 0.0, %v1065
      %v1067 = vpop.f32.mrf.mxu0
      %1068 = vdwg.mxu0
      %v1069 = vadd.f32 %v993, %v1066
      %v1070 = vxor.u32 %v1069, 2147483648
      %v1071 = vmul.f32 %v1070, 1.442695
      %v1072 = vpow.pop %v1071
      %v1073 = vadd.f32 %v1072, 1.0
      %v1074 = vrcp.pop %v1073
      %v1075 = vmul.f32 1.0, %v1074
      %v1076 = vtanh.pop %v1069
      %v1077 = vmul.f32 %v1075, %v989
      %1079 = vrot.lane.b32.xlu0 %v1076, 64
      %v1080 = vpop.permute.xlu0 %1079
      %v1082 = vmul.f32 %v1075, %v1080
      %1084 = vrot.lane.b32.xlu0 %v1082, 32
      %v1085 = vpop.permute.xlu0 %1084
      %v1087 = vadd.f32 %v1077, %v1085
      %v1088 = vtanh.pop %v1087
      %1090 = vrot.lane.b32.xlu0 %v1088, 64
      %v1091 = vpop.permute.xlu0 %1090
      %v1093 = vmul.f32 %v1075, %v1091
      %v1094 = vstv %s990
      %vm1095 = vcmp.lt.s32.totalorder %v1094, %v421
      %v1096 = vsel %vm1095, 1, 0
      %1097 = vset.pattern.permute.xlu0 0
      %1098 = vperm.xlu0 %1097, %v1096
      %v1099 = vpop.permute.xlu0 %1098
      %vm1100 = vcmp.eq.s32.totalorder %v1099, 1
      %v1101 = vsel %vm1100, %v1093, %v988
      %v1102 = vsel %vm1100, %v1087, %v989
      %s1103 = scalar_select %p426, 6, 1
      %s1104 = smul.u32 %s1103, 8
      %s1105 = scalar_lea.vmem [#allocation2], %s1104
      %v1106 = vld [vmem:[%s1105] sm:$0xff]
      %1108 = vrot.lane.b32.xlu0 %v1101, 32
      %v1109 = vpop.permute.xlu0 %1108
      %v1110 = vsel %vm276, %v1109, 0
      %1112 = vmatprep.subr.mxu0 0.0
      %1113 = vmatpush1.msra.mxu0 0.0
      %1114 = vmatprep.subr.mxu0 0.0
      %1115 = vmatpush1.msra.mxu0 0.0
      %1116 = vmatprep.subr.mxu0 0.0
      %1117 = vmatpush1.msra.mxu0 0.0
      %1118 = vmatprep.subr.mxu0 0.0
      %1119 = vmatpush1.msra.mxu0 0.0
      %1120 = vmatprep.subr.mxu0 0.0
      %1121 = vmatpush1.msra.mxu0 0.0
      %1122 = vmatprep.subr.mxu0 0.0
      %1123 = vmatpush1.msra.mxu0 0.0
      %1124 = vmatprep.subr.mxu0 0.0
      %1125 = vmatpush1.msra.mxu0 0.0
      %1126 = vmatprep.subr.mxu0 0.0
      %1127 = vmatpush1.msra.mxu0 0.0
      %1128 = vmatprep.subr.mxu0 0.0
      %1129 = vmatpush1.msra.mxu0 0.0
      %1130 = vmatprep.subr.mxu0 0.0
      %1131 = vmatpush1.msra.mxu0 0.0
      %1132 = vmatprep.subr.mxu0 0.0
      %1133 = vmatpush1.msra.mxu0 0.0
      %1134 = vmatprep.subr.mxu0 0.0
      %1135 = vmatpush1.msra.mxu0 0.0
      %1136 = vmatprep.subr.mxu0 0.0
      %1137 = vmatpush1.msra.mxu0 %v425
      %1138 = vmatprep.subr.mxu0 0.0
      %1139 = vmatpush1.msra.mxu0 %v424
      %1140 = vmatprep.subr.mxu0 0.0
      %1141 = vmatpush1.msra.mxu0 %v423
      %1142 = vmatprep.subr.mxu0 0.0
      %1143 = vmatpush1.msra.mxu0 %v422
      %1144 = vmatprep.subr.mxu0 0.0
      %1145 = vmatpush2.msra.mxu0 0.0
      %1146 = vmatprep.subr.mxu0 0.0
      %1147 = vmatpush2.msra.mxu0 0.0
      %1148 = vmatprep.subr.mxu0 0.0
      %1149 = vmatpush2.msra.mxu0 0.0
      %1150 = vmatprep.subr.mxu0 0.0
      %1151 = vmatpush2.msra.mxu0 0.0
      %1152 = vmatprep.subr.mxu0 0.0
      %1153 = vmatpush2.msra.mxu0 0.0
      %1154 = vmatprep.subr.mxu0 0.0
      %1155 = vmatpush2.msra.mxu0 0.0
      %1156 = vmatprep.subr.mxu0 0.0
      %1157 = vmatpush2.msra.mxu0 0.0
      %1158 = vmatprep.subr.mxu0 0.0
      %1159 = vmatpush2.msra.mxu0 0.0
      %1160 = vmatprep.subr.mxu0 0.0
      %1161 = vmatpush2.msra.mxu0 0.0
      %1162 = vmatprep.subr.mxu0 0.0
      %1163 = vmatpush2.msra.mxu0 0.0
      %1164 = vmatprep.subr.mxu0 0.0
      %1165 = vmatpush2.msra.mxu0 0.0
      %1166 = vmatprep.subr.mxu0 0.0
      %1167 = vmatpush2.msra.mxu0 0.0
      %1168 = vmatprep.subr.mxu0 0.0
      %1169 = vmatpush2.msra.mxu0 0.0
      %1170 = vmatprep.subr.mxu0 0.0
      %1171 = vmatpush2.msra.mxu0 0.0
      %1172 = vmatprep.subr.mxu0 0.0
      %1173 = vmatpush2.msra.mxu0 0.0
      %1174 = vmatprep.subr.mxu0 0.0
      %1175 = vmatpush2.msra.mxu0 0.0
      %1176 = vmatprep.mubr.f32.mxu0 0.0
      %1177 = vmatmul.mubr.f32.gmra.mxu0 %v1110
      %v1178 = vpop.f32.mrf.mxu0
      %v1179 = vadd.f32 0.0, %v1178
      %v1180 = vpop.f32.mrf.mxu0
      %1181 = vdwg.mxu0
      %v1182 = vadd.f32 %v1106, %v1179
      %v1183 = vxor.u32 %v1182, 2147483648
      %v1184 = vmul.f32 %v1183, 1.442695
      %v1185 = vpow.pop %v1184
      %v1186 = vadd.f32 %v1185, 1.0
      %v1187 = vrcp.pop %v1186
      %v1188 = vmul.f32 1.0, %v1187
      %v1189 = vtanh.pop %v1182
      %v1190 = vmul.f32 %v1188, %v1102
      %1192 = vrot.lane.b32.xlu0 %v1189, 64
      %v1193 = vpop.permute.xlu0 %1192
      %v1195 = vmul.f32 %v1188, %v1193
      %1197 = vrot.lane.b32.xlu0 %v1195, 32
      %v1198 = vpop.permute.xlu0 %1197
      %v1200 = vadd.f32 %v1190, %v1198
      %v1201 = vtanh.pop %v1200
      %1203 = vrot.lane.b32.xlu0 %v1201, 64
      %v1204 = vpop.permute.xlu0 %1203
      %v1206 = vmul.f32 %v1188, %v1204
      %v1207 = vstv %s1103
      %vm1208 = vcmp.lt.s32.totalorder %v1207, %v421
      %v1209 = vsel %vm1208, 1, 0
      %1210 = vset.pattern.permute.xlu0 0
      %1211 = vperm.xlu0 %1210, %v1209
      %v1212 = vpop.permute.xlu0 %1211
      %vm1213 = vcmp.eq.s32.totalorder %v1212, 1
      %v1214 = vsel %vm1213, %v1206, %v1101
      %v1215 = vsel %vm1213, %v1200, %v1102
      %s1216 = scalar_select %p426, 7, 0
      %s1217 = smul.u32 %s1216, 8
      %s1218 = scalar_lea.vmem [#allocation2], %s1217
      %v1219 = vld [vmem:[%s1218] sm:$0xff]
      %1221 = vrot.lane.b32.xlu0 %v1214, 32
      %v1222 = vpop.permute.xlu0 %1221
      %v1223 = vsel %vm276, %v1222, 0
      %1225 = vmatprep.subr.mxu0 0.0
      %1226 = vmatpush1.msra.mxu0 0.0
      %1227 = vmatprep.subr.mxu0 0.0
      %1228 = vmatpush1.msra.mxu0 0.0
      %1229 = vmatprep.subr.mxu0 0.0
      %1230 = vmatpush1.msra.mxu0 0.0
      %1231 = vmatprep.subr.mxu0 0.0
      %1232 = vmatpush1.msra.mxu0 0.0
      %1233 = vmatprep.subr.mxu0 0.0
      %1234 = vmatpush1.msra.mxu0 0.0
      %1235 = vmatprep.subr.mxu0 0.0
      %1236 = vmatpush1.msra.mxu0 0.0
      %1237 = vmatprep.subr.mxu0 0.0
      %1238 = vmatpush1.msra.mxu0 0.0
      %1239 = vmatprep.subr.mxu0 0.0
      %1240 = vmatpush1.msra.mxu0 0.0
      %1241 = vmatprep.subr.mxu0 0.0
      %1242 = vmatpush1.msra.mxu0 0.0
      %1243 = vmatprep.subr.mxu0 0.0
      %1244 = vmatpush1.msra.mxu0 0.0
      %1245 = vmatprep.subr.mxu0 0.0
      %1246 = vmatpush1.msra.mxu0 0.0
      %1247 = vmatprep.subr.mxu0 0.0
      %1248 = vmatpush1.msra.mxu0 0.0
      %1249 = vmatprep.subr.mxu0 0.0
      %1250 = vmatpush1.msra.mxu0 %v425
      %1251 = vmatprep.subr.mxu0 0.0
      %1252 = vmatpush1.msra.mxu0 %v424
      %1253 = vmatprep.subr.mxu0 0.0
      %1254 = vmatpush1.msra.mxu0 %v423
      %1255 = vmatprep.subr.mxu0 0.0
      %1256 = vmatpush1.msra.mxu0 %v422
      %1257 = vmatprep.subr.mxu0 0.0
      %1258 = vmatpush2.msra.mxu0 0.0
      %1259 = vmatprep.subr.mxu0 0.0
      %1260 = vmatpush2.msra.mxu0 0.0
      %1261 = vmatprep.subr.mxu0 0.0
      %1262 = vmatpush2.msra.mxu0 0.0
      %1263 = vmatprep.subr.mxu0 0.0
      %1264 = vmatpush2.msra.mxu0 0.0
      %1265 = vmatprep.subr.mxu0 0.0
      %1266 = vmatpush2.msra.mxu0 0.0
      %1267 = vmatprep.subr.mxu0 0.0
      %1268 = vmatpush2.msra.mxu0 0.0
      %1269 = vmatprep.subr.mxu0 0.0
      %1270 = vmatpush2.msra.mxu0 0.0
      %1271 = vmatprep.subr.mxu0 0.0
      %1272 = vmatpush2.msra.mxu0 0.0
      %1273 = vmatprep.subr.mxu0 0.0
      %1274 = vmatpush2.msra.mxu0 0.0
      %1275 = vmatprep.subr.mxu0 0.0
      %1276 = vmatpush2.msra.mxu0 0.0
      %1277 = vmatprep.subr.mxu0 0.0
      %1278 = vmatpush2.msra.mxu0 0.0
      %1279 = vmatprep.subr.mxu0 0.0
      %1280 = vmatpush2.msra.mxu0 0.0
      %1281 = vmatprep.subr.mxu0 0.0
      %1282 = vmatpush2.msra.mxu0 0.0
      %1283 = vmatprep.subr.mxu0 0.0
      %1284 = vmatpush2.msra.mxu0 0.0
      %1285 = vmatprep.subr.mxu0 0.0
      %1286 = vmatpush2.msra.mxu0 0.0
      %1287 = vmatprep.subr.mxu0 0.0
      %1288 = vmatpush2.msra.mxu0 0.0
      %1289 = vmatprep.mubr.f32.mxu0 0.0
      %1290 = vmatmul.mubr.f32.gmra.mxu0 %v1223
      %v1291 = vpop.f32.mrf.mxu0
      %v1292 = vadd.f32 0.0, %v1291
      %v1293 = vpop.f32.mrf.mxu0
      %1294 = vdwg.mxu0
      %v1295 = vadd.f32 %v1219, %v1292
      %v1296 = vxor.u32 %v1295, 2147483648
      %v1297 = vmul.f32 %v1296, 1.442695
      %v1298 = vpow.pop %v1297
      %v1299 = vadd.f32 %v1298, 1.0
      %v1300 = vrcp.pop %v1299
      %v1301 = vmul.f32 1.0, %v1300
      %v1302 = vtanh.pop %v1295
      %v1303 = vmul.f32 %v1301, %v1215
      %1305 = vrot.lane.b32.xlu0 %v1302, 64
      %v1306 = vpop.permute.xlu0 %1305
      %v1308 = vmul.f32 %v1301, %v1306
      %1310 = vrot.lane.b32.xlu0 %v1308, 32
      %v1311 = vpop.permute.xlu0 %1310
      %v1313 = vadd.f32 %v1303, %v1311
      %v1314 = vtanh.pop %v1313
      %1316 = vrot.lane.b32.xlu0 %v1314, 64
      %v1317 = vpop.permute.xlu0 %1316
      %v1319 = vmul.f32 %v1301, %v1317
      %v1320 = vstv %s1216
      %vm1321 = vcmp.lt.s32.totalorder %v1320, %v421
      %v1322 = vsel %vm1321, 1, 0
      %1323 = vset.pattern.permute.xlu0 0
      %1324 = vperm.xlu0 %1323, %v1322
      %v1325 = vpop.permute.xlu0 %1324
      %vm1326 = vcmp.eq.s32.totalorder %v1325, 1
      %v1327 = vsel %vm1326, %v1319, %v1214
      %1329 = vrot.lane.b32.xlu0 %v1327, 32
      %v1330 = vpop.permute.xlu0 %1329
      %1332 = vst.msk [vmem:[%s256] sm:$0xff] %vm276, %v1330
      %p1333 = scmp.lt.s32.totalorder %s16, 1
      %s1334 = scalar_select %p1333, %s16, 1
      %s1335 = smul.addr %s1334, 8
      %s1336 = scalar_lea.vmem %s5, %s1335
      // Predicated region
      $region41: #{question_encoder_forward.1} parent=39 // pred_check
        %p1337 = pneg %p154
      $region42: #{question_encoder_forward.1} parent=39 // pred_check_branch
        %1339 = sbr.rel (%p1337) target = $region44
      $region43: #{question_encoder_forward.1} parent=39 // pred_region
        _
      $region44: #{question_encoder_forward.1} parent=39 // pred_fallthru
        _
    $region40: #{question_encoder_forward.1} parent=5 // pred_fallthru
      _
    %p1340 = scmp.le.s32.totalorder 2, %s11
    // Predicated region
    $region45: #{question_encoder_forward.1} parent=5 // pred_check
      %p1341 = pneg %p1340
    $region46: #{question_encoder_forward.1} parent=5 // pred_check_branch
      %1343 = sbr.rel (%p1341) target = $region48
    $region47: #{question_encoder_forward.1} parent=5 // pred_region
      %s1344 = ssub.s32 %s11, 2
      // Predicated region
      $region49: #{question_encoder_forward.1} parent=47 // pred_check
        %p1345 = pneg %p160
      $region50: #{question_encoder_forward.1} parent=47 // pred_check_branch
        %1347 = sbr.rel (%p1345) target = $region52
      $region51: #{question_encoder_forward.1} parent=47 // pred_region
        %p1348 = scmp.lt.s32.totalorder %s17, 1
        %s1349 = scalar_select %p1348, %s17, 1
        %s1350 = smul.addr %s1349, 8
        %s1351 = scalar_lea.vmem %s5, %s1350
      $region52: #{question_encoder_forward.1} parent=47 // pred_fallthru
        _
    $region48: #{question_encoder_forward.1} parent=5 // pred_fallthru
      _
  $region6: #{question_encoder_forward.1} parent=0 // loop_footer
    %s15 = sadd.s32 1, %s11
  $region7: #{question_encoder_forward.1} parent=0 // loop_footer_branch
    %10 = sbr.rel target = $region3
  $region8: #{question_encoder_forward.1} parent=0 // loop_exit
    _

</llo_original>
